<compile_context>
chip_gen: v5e
topology: v5e:2x2
jax: 0.10.0
libtpu: 0.0.40
codegen_flags: <defaults>
</compile_context>

<pallas_src>
import functools
import math

import jax
import jax.numpy as jnp
from jax.experimental import pallas as pl
from jax.experimental.pallas import tpu as pltpu

_LANE = 128


# -----------------------------------------------------------------------------
# Pallas kernel: windowed attention with relative-position bias
# -----------------------------------------------------------------------------

def _window_attn_kernel(q_ref, k_ref, v_ref, b_ref, o_ref, *, scale):
    """Windowed attention, windows on the 128-lane axis.

    q/k/v/o refs: (LH, hd, Nr, TW)    -- TW windows live on the lane axis.
    b ref:        (LH, Nr_k, Nr_q, 1) -- bias pre-transposed so the softmax
                                         (key) axis is a leading axis.
    The contraction axes (hd, Nr) are tiny, so they are unrolled static loops
    of lane-dense VPU multiply-accumulates; softmax reductions are over leading
    axes (elementwise VPU max/add); exp/reciprocal go to the EUP.
    NOTE: this layout is chosen for small Nr/head_dim (the module's config);
    large window_size configs would want an MXU path instead.
    """
    lh, hd, nr, tw = q_ref.shape
    q = q_ref[...].astype(jnp.float32)
    k = k_ref[...].astype(jnp.float32)
    v = v_ref[...].astype(jnp.float32)
    b = b_ref[...].astype(jnp.float32)            # (LH, Nr_k, Nr_q, 1)

    # s[h, k, q, w] = sum_d q[h, d, q, w] * k[h, d, k, w]
    s = q[:, 0, None, :, :] * k[:, 0, :, None, :]
    for d in range(1, hd):
        s = s + q[:, d, None, :, :] * k[:, d, :, None, :]
    s = s * scale + b                             # scale folded into bias add

    # numerically-stable softmax over the key axis (axis=1, a leading axis)
    s = s - jnp.max(s, axis=1, keepdims=True)
    p = jnp.exp(s)
    p = p * pl.reciprocal(jnp.sum(p, axis=1, keepdims=True), approx=True)

    # o[h, d, q, w] = sum_k p[h, k, q, w] * v[h, d, k, w]
    o = p[:, 0, None, :, :] * v[:, :, 0, None, :]
    for kk in range(1, nr):
        o = o + p[:, kk, None, :, :] * v[:, :, kk, None, :]
    o_ref[...] = o.astype(o_ref.dtype)


def _vmem_limit_bytes():
    """Generation-aware VMEM limit (<= ~48 MiB on v7x, up to 96 MiB on v5e/v6e)."""
    cap = 128 << 20
    try:
        info = pltpu.get_tpu_info()
        cap = int(getattr(info, "vmem_capacity_bytes", cap))
    except Exception:
        cap = 64 << 20      # conservative fallback
    return max(32 << 20, min(cap * 3 // 4, 96 << 20))


def _pick_window_tile(bw_pad, lh, nr, hd, itemsize, budget_bytes):
    """Largest window-tile (multiple of 128, divisor of bw_pad) whose *padded*
    per-block footprint (incl. double buffering and f32 temporaries) fits."""
    nr8 = ((nr + 7) // 8) * 8                       # sublane padding
    # q,k,v,out blocks, double-buffered:
    io = 4 * 2 * lh * hd * nr8 * itemsize
    # f32 copies of q/k/v/o plus the s/p score tensors (per lane column):
    tmp = lh * (4 * hd * nr8 + 3 * nr * nr8) * 4
    per_window = max(io + tmp, 1)
    bias_bytes = 2 * lh * nr * nr8 * _LANE * 4      # small constant
    budget = max(budget_bytes - bias_bytes, per_window * _LANE)
    max_tw = max(_LANE, (budget // per_window) // _LANE * _LANE)

    tw, d = _LANE, _LANE
    while d <= bw_pad:
        if bw_pad % d == 0 and d <= max_tw:
            tw = d
        d += _LANE
    # keep >= 2 grid steps when possible so megacore (v7x) has work to shard
    if bw_pad // tw < 2 and bw_pad >= 2 * _LANE:
        target, d, best = bw_pad // 2, _LANE, _LANE
        while d <= target:
            if bw_pad % d == 0:
                best = d
            d += _LANE
        tw = best
    return tw


def window_attention(q, k, v, rel_bias, scale):
    """q,k,v: (BW, LH, Nr, hd); rel_bias: (LH, Nr, Nr) -> (BW, LH, Nr, hd)."""
    bw, lh, nr, hd = q.shape
    itemsize = jnp.dtype(q.dtype).itemsize

    # windows-on-lanes re-layout: (LH, hd, Nr, BW); pad BW to a lane multiple.
    # (wrapper-side layout plumbing; padded windows are independent & discarded)
    def to_lane(t):
        return jnp.transpose(t, (1, 3, 2, 0))

    bw_pad = ((bw + _LANE - 1) // _LANE) * _LANE
    pad = bw_pad - bw
    ql, kl, vl = (to_lane(t) for t in (q, k, v))
    if pad:
        pad_cfg = ((0, 0), (0, 0), (0, 0), (0, pad))
        ql, kl, vl = (jnp.pad(t, pad_cfg) for t in (ql, kl, vl))

    # bias pre-transposed to (LH, Nr_k, Nr_q, 1): softmax axis leading, trailing
    # size-1 lane axis so the in-kernel broadcast is a plain lane splat.
    bias_t = jnp.transpose(rel_bias, (0, 2, 1)).astype(jnp.float32)[..., None]

    limit = _vmem_limit_bytes()
    tw = _pick_window_tile(bw_pad, lh, nr, hd, itemsize, budget_bytes=limit // 2)
    grid = (bw_pad // tw,)

    qkv_spec = pl.BlockSpec((lh, hd, nr, tw), lambda w: (0, 0, 0, w))
    bias_spec = pl.BlockSpec((lh, nr, nr, 1), lambda w: (0, 0, 0, 0))
    out_spec = pl.BlockSpec((lh, hd, nr, tw), lambda w: (0, 0, 0, w))

    cost = pl.CostEstimate(
        flops=int(4 * bw_pad * lh * nr * nr * hd),            # q@k^T and p@v
        transcendentals=int(bw_pad * lh * nr * nr),            # exp in softmax
        bytes_accessed=int(itemsize * 4 * bw_pad * lh * nr * hd
                           + 4 * lh * nr * nr),
    )

    out = pl.pallas_call(
        functools.partial(_window_attn_kernel, scale=float(scale)),
        out_shape=jax.ShapeDtypeStruct((lh, hd, nr, bw_pad), q.dtype),
        grid=grid,
        in_specs=[qkv_spec, qkv_spec, qkv_spec, bias_spec],
        out_specs=out_spec,
        compiler_params=pltpu.CompilerParams(
            dimension_semantics=("parallel",),
            vmem_limit_bytes=int(limit),
        ),
        cost_estimate=cost,
    )(ql, kl, vl, bias_t)

    out = out[..., :bw]
    return jnp.transpose(out, (3, 0, 2, 1))        # back to (BW, LH, Nr, hd)


def _window_attention_ref(q, k, v, rel_bias, scale):
    """Pure-JAX reference for the Pallas kernel (verification only)."""
    s = jnp.einsum("whqd,whkd->whqk", q * scale, k) + rel_bias[None]
    p = jax.nn.softmax(s, axis=-1)
    return jnp.einsum("whqk,whkd->whqd", p, v)


# -----------------------------------------------------------------------------
# Module glue (faithful translation of the PyTorch forward)
# -----------------------------------------------------------------------------

def _relative_position_index(ws):
    # NOTE: faithfully uses the module's stride multipliers (3*ws-1, 2*ws-1, 1).
    coords = jnp.stack(jnp.meshgrid(jnp.arange(ws), jnp.arange(ws), jnp.arange(ws),
                                    indexing="ij"))                    # (3, ws, ws, ws)
    flat = coords.reshape(3, -1)
    rel = flat[:, :, None] - flat[:, None, :]
    rel = jnp.transpose(rel, (1, 2, 0)) + (ws - 1)
    rel = rel * jnp.array([3 * ws - 1, 2 * ws - 1, 1])
    return rel.sum(-1)                                                  # (ws^3, ws^3)


def _linear_resize_axis(x, axis, out_size):
    """1-D linear resize along `axis`, matching F.interpolate(align_corners=False)."""
    in_size = x.shape[axis]
    if in_size == out_size:
        return x
    scl = in_size / out_size
    o = jnp.arange(out_size, dtype=jnp.float32)
    src = jnp.maximum(scl * (o + 0.5) - 0.5, 0.0)
    i0 = jnp.minimum(jnp.floor(src).astype(jnp.int32), in_size - 1)
    i1 = jnp.minimum(i0 + 1, in_size - 1)
    w = src - i0.astype(jnp.float32)
    x0 = jnp.take(x, i0, axis=axis)
    x1 = jnp.take(x, i1, axis=axis)
    shape = [1] * x.ndim
    shape[axis] = out_size
    w = w.reshape(shape)
    return x0 * (1.0 - w) + x1 * w


def _trilinear_resize(x, out_dhw):
    for ax, os in zip((-3, -2, -1), out_dhw):
        x = _linear_resize_axis(x, x.ndim + ax, os)
    return x


def _merge_regions_spatial(x6, merge_size):
    """x6: (3, B, H, R, N, C_h)  ->  (3*B, H, new_R, N, C_h)   (avg+max pooling)."""
    _, b, hh, r_tot, nn, c_h = x6.shape
    x = x6.reshape(-1, hh, r_tot, nn, c_h)
    b_ = x.shape[0]
    grid_size = math.ceil((r_tot // merge_size ** 3) ** (1.0 / 3.0))
    new_r = grid_size ** 3
    r = math.ceil(r_tot ** (1.0 / 3.0))
    assert r % merge_size == 0, "region cube must be divisible by merge_size"
    g = r // merge_size
    assert g == grid_size, "inconsistent merge grid"

    xr = x.reshape(b_, hh, r, r, r, nn, c_h)
    xp = jnp.transpose(xr, (0, 1, 6, 5, 2, 3, 4)).reshape(b_, hh * c_h * nn, r, r, r)
    blocks = xp.reshape(b_, hh * c_h * nn, g, merge_size, g, merge_size, g, merge_size)
    x_avg = blocks.mean(axis=(3, 5, 7))
    x_max = blocks.max(axis=(3, 5, 7))

    def back(t):
        t = t.reshape(b_, hh, c_h, nn, g, g, g)
        return jnp.transpose(t, (0, 1, 4, 5, 6, 3, 2)).reshape(b_, hh, new_r, nn, c_h)

    return back(x_avg) + back(x_max)


def _upsample(y, n_g):
    """y: (B, l_h, R, Nr, C_h) -> (B, l_h, N_G, Nr, C_h) via trilinear interpolation."""
    b, l_h, r_tot, nn, c_h = y.shape
    r = math.ceil(r_tot ** (1.0 / 3.0))
    out_size = math.ceil(n_g ** (1.0 / 3.0))
    assert out_size ** 3 == n_g, "N_G must be a perfect cube"
    perm = jnp.transpose(y, (0, 1, 4, 3, 2)).reshape(b, l_h * c_h * nn, r, r, r)
    up = _trilinear_resize(perm, (out_size, out_size, out_size))
    up = up.reshape(b, l_h, c_h, nn, n_g)
    return jnp.transpose(up, (0, 1, 4, 3, 2))


def multi_scale_attention_forward(x, D, H, W, params, *, num_heads,
                                  n_local_region_scales, window_size,
                                  qk_scale=None, use_pallas=True):
    """Faithful port of MultiScaleAttention.forward (eval mode, dropout p=0)."""
    B, N, C = x.shape
    ws = window_size
    assert N == D * H * W
    assert C % num_heads == 0 and num_heads % n_local_region_scales == 0
    assert D % ws == 0 and H % ws == 0 and W % ws == 0

    head_dim = C // num_heads
    local_head = num_heads // n_local_region_scales
    local_c = C // n_local_region_scales
    scale = qk_scale if qk_scale is not None else head_dim ** (-0.5)
    n_g = (D // ws) * (H // ws) * (W // ws)
    nr = ws ** 3
    b_windows = B * n_g

    w_qkv, b_qkv = params["w_qkv"], params["b_qkv"]
    w_proj, b_proj = params["w_proj"], params["b_proj"]
    rpb_table = params["rel_pos_bias_table"]

    # qkv projection (dense GEMM left to XLA).  NOTE: the torch module computes
    # window_partition(x) but only uses its *shape*; the qkv tensor is reshaped
    # from raw memory order, which is exactly what we do here.
    qkv_all = x @ w_qkv.T
    if b_qkv is not None:
        qkv_all = qkv_all + b_qkv
    temp = jnp.transpose(qkv_all.reshape(b_windows, nr, 3, C), (2, 0, 1, 3))  # (3,B_,Nr,C)

    # relative-position bias, shared by every scale: (local_head, Nr, Nr)
    rel_index = _relative_position_index(ws)
    rel_bias = rpb_table[rel_index.reshape(-1)].reshape(nr, nr, local_head)
    rel_bias = jnp.transpose(rel_bias, (2, 0, 1)).astype(jnp.float32)

    # ---- build per-scale q/k/v and batch ALL scales into one kernel call ----
    qs, ks, vs, split_sizes = [], [], [], []
    for i in range(n_local_region_scales):
        qkv = temp[:, :, :, i * local_c:(i + 1) * local_c]        # (3, B_, Nr, local_C)
        qkv = qkv.reshape(3, b_windows, nr, local_head, head_dim)
        qkv = jnp.transpose(qkv, (0, 1, 3, 2, 4))                 # (3, B_, lh, Nr, hd)
        if i > 0:
            merge = 2 ** i
            qkv = qkv.reshape(3, B, n_g, local_head, nr, head_dim)
            qkv = jnp.transpose(qkv, (0, 1, 3, 2, 4, 5))          # (3, B, lh, N_G, Nr, hd)
            qkv = _merge_regions_spatial(qkv, merge)              # (3B, lh, new_R, Nr, hd)
            new_r = qkv.shape[2]
            qkv = jnp.transpose(qkv, (0, 2, 1, 3, 4)).reshape(
                3, B * new_r, local_head, nr, head_dim)
        qs.append(qkv[0]); ks.append(qkv[1]); vs.append(qkv[2])
        split_sizes.append(qkv.shape[1])

    q_all = jnp.concatenate(qs, axis=0)                           # (BW_total, lh, Nr, hd)
    k_all = jnp.concatenate(ks, axis=0)
    v_all = jnp.concatenate(vs, axis=0)

    if use_pallas:
        y_all = window_attention(q_all, k_all, v_all, rel_bias, scale)
    else:
        y_all = _window_attention_ref(q_all, k_all, v_all, rel_bias, scale)
    # TODO(synk): attn_drop is p=0.0 (identity); RNG dropout not implemented.

    outs, off = [], 0
    for i in range(n_local_region_scales):
        sz = split_sizes[i]
        y = y_all[off:off + sz]
        off += sz
        out_size = (D // 2 ** i, H // 2 ** i, W // 2 ** i)
        n_region = (out_size[0] // ws) * (out_size[1] // ws) * (out_size[2] // ws)
        y = y.reshape(B, n_region, local_head, nr, head_dim)
        y = jnp.transpose(y, (0, 2, 1, 3, 4))                     # (B, lh, n_region, Nr, hd)
        if i > 0:
            y = _upsample(y, n_g)                                 # (B, lh, N_G, Nr, hd)
        outs.append(y)

    fused = jnp.concatenate(outs, axis=1)                         # (B, heads, N_G, Nr, hd)
    fused = fused.reshape(B, num_heads, -1, head_dim)
    fused = jnp.transpose(fused, (0, 2, 1, 3)).reshape(B, N, C)
    out = fused @ w_proj.T + b_proj                               # output projection
    # TODO(synk): proj_drop is p=0.0 (identity); RNG dropout not implemented.
    return out


# -----------------------------------------------------------------------------
# Demo / correctness check
# -----------------------------------------------------------------------------

if __name__ == "__main__":
    num_heads = 6
    n_local_region_scales = 3
    window_size = 2
    dim = 24                      # head_dim = 4, local_head = 2
    B = 2
    D = H = W = 8                 # N = 512, N_G = 64, Nr = 8
    N = D * H * W
    local_head = num_heads // n_local_region_scales

    key = jax.random.PRNGKey(0)
    kx, kq, kp, kb, kr = jax.random.split(key, 5)

    x = jax.random.normal(kx, (B, N, dim), dtype=jnp.float32)
    params = {
        "w_qkv": 0.02 * jax.random.normal(kq, (3 * dim, dim), dtype=jnp.float32),
        "b_qkv": None,            # qkv_bias=False (module default)
        "w_proj": 0.02 * jax.random.normal(kp, (dim, dim), dtype=jnp.float32),
        "b_proj": 0.02 * jax.random.normal(kb, (dim,), dtype=jnp.float32),
        "rel_pos_bias_table": 0.02 * jax.random.normal(
            kr, ((2 * window_size - 1) ** 3, local_head), dtype=jnp.float32),
    }

    fwd = functools.partial(
        multi_scale_attention_forward,
        num_heads=num_heads,
        n_local_region_scales=n_local_region_scales,
        window_size=window_size,
    )

    fwd_pallas = jax.jit(functools.partial(fwd, use_pallas=True),
                         static_argnums=(1, 2, 3))
    y = fwd_pallas(x, D, H, W, params)
    jax.block_until_ready(y)

    y_ref = fwd(x, D, H, W, params, use_pallas=False)
    assert y.shape == (B, N, dim)
    # tolerance allows for the EUP approximate-reciprocal in the softmax
    assert jnp.allclose(y, y_ref, atol=1e-3, rtol=1e-3), \
        float(jnp.max(jnp.abs(y - y_ref)))

    print("KERNEL_OK")
</pallas_src>

<mosaic_0001>
module attributes {stable_mosaic.version = 11 : i64} {
  func.func @_window_attn_kernel(%arg0: i32, %arg1: memref<2x4x8x128xf32, #tpu.memory_space<vmem>>, %arg2: memref<2x4x8x128xf32, #tpu.memory_space<vmem>>, %arg3: memref<2x4x8x128xf32, #tpu.memory_space<vmem>>, %arg4: memref<2x8x8x1xf32, #tpu.memory_space<vmem>>, %arg5: memref<2x4x8x128xf32, #tpu.memory_space<vmem>>) attributes {dimension_semantics = [#tpu.dimension_semantics<parallel>], iteration_bounds = array<i64: 2>, scalar_prefetch = 0 : i64, scratch_operands = 0 : i64, tpu.core_type = #tpu.core_type<tc>, window_params = [{transform_indices = @transform_0, window_bounds = array<i64: 2, 4, 8, 128>}, {transform_indices = @transform_1, window_bounds = array<i64: 2, 4, 8, 128>}, {transform_indices = @transform_2, window_bounds = array<i64: 2, 4, 8, 128>}, {pipeline_mode = #tpu.pipeline_mode<synchronous>, transform_indices = @transform_3, window_bounds = array<i64: 2, 8, 8, 1>}, {transform_indices = @transform_4, window_bounds = array<i64: 2, 4, 8, 128>}]} {
    %c0 = arith.constant 0 : index
    %c0_0 = arith.constant 0 : index
    %c0_1 = arith.constant 0 : index
    %c0_2 = arith.constant 0 : index
    %0 = vector.load %arg1[%c0, %c0_0, %c0_1, %c0_2] : memref<2x4x8x128xf32, #tpu.memory_space<vmem>>, vector<2x4x8x128xf32>
    %c0_3 = arith.constant 0 : index
    %c0_4 = arith.constant 0 : index
    %c0_5 = arith.constant 0 : index
    %c0_6 = arith.constant 0 : index
    %1 = vector.load %arg2[%c0_3, %c0_4, %c0_5, %c0_6] : memref<2x4x8x128xf32, #tpu.memory_space<vmem>>, vector<2x4x8x128xf32>
    %c0_7 = arith.constant 0 : index
    %c0_8 = arith.constant 0 : index
    %c0_9 = arith.constant 0 : index
    %c0_10 = arith.constant 0 : index
    %2 = vector.load %arg3[%c0_7, %c0_8, %c0_9, %c0_10] : memref<2x4x8x128xf32, #tpu.memory_space<vmem>>, vector<2x4x8x128xf32>
    %c0_11 = arith.constant 0 : index
    %c0_12 = arith.constant 0 : index
    %c0_13 = arith.constant 0 : index
    %c0_14 = arith.constant 0 : index
    %3 = vector.load %arg4[%c0_11, %c0_12, %c0_13, %c0_14] : memref<2x8x8x1xf32, #tpu.memory_space<vmem>>, vector<2x8x8x1xf32>
    %4 = vector.extract_strided_slice %0 {offsets = [0, 0, 0, 0], sizes = [2, 1, 8, 128], strides = [1, 1, 1, 1]} : vector<2x4x8x128xf32> to vector<2x1x8x128xf32>
    %5 = vector.shape_cast %4 : vector<2x1x8x128xf32> to vector<2x8x128xf32>
    %6 = vector.shape_cast %5 : vector<2x8x128xf32> to vector<2x1x8x128xf32>
    %7 = vector.extract_strided_slice %1 {offsets = [0, 0, 0, 0], sizes = [2, 1, 8, 128], strides = [1, 1, 1, 1]} : vector<2x4x8x128xf32> to vector<2x1x8x128xf32>
    %8 = vector.shape_cast %7 : vector<2x1x8x128xf32> to vector<2x8x128xf32>
    %9 = vector.shape_cast %8 : vector<2x8x128xf32> to vector<2x8x1x128xf32>
    %10 = vector.broadcast %6 : vector<2x1x8x128xf32> to vector<2x8x8x128xf32>
    %11 = vector.broadcast %9 : vector<2x8x1x128xf32> to vector<2x8x8x128xf32>
    %12 = arith.mulf %10, %11 : vector<2x8x8x128xf32>
    %13 = vector.extract_strided_slice %0 {offsets = [0, 1, 0, 0], sizes = [2, 1, 8, 128], strides = [1, 1, 1, 1]} : vector<2x4x8x128xf32> to vector<2x1x8x128xf32>
    %14 = vector.shape_cast %13 : vector<2x1x8x128xf32> to vector<2x8x128xf32>
    %15 = vector.shape_cast %14 : vector<2x8x128xf32> to vector<2x1x8x128xf32>
    %16 = vector.extract_strided_slice %1 {offsets = [0, 1, 0, 0], sizes = [2, 1, 8, 128], strides = [1, 1, 1, 1]} : vector<2x4x8x128xf32> to vector<2x1x8x128xf32>
    %17 = vector.shape_cast %16 : vector<2x1x8x128xf32> to vector<2x8x128xf32>
    %18 = vector.shape_cast %17 : vector<2x8x128xf32> to vector<2x8x1x128xf32>
    %19 = vector.broadcast %15 : vector<2x1x8x128xf32> to vector<2x8x8x128xf32>
    %20 = vector.broadcast %18 : vector<2x8x1x128xf32> to vector<2x8x8x128xf32>
    %21 = arith.mulf %19, %20 : vector<2x8x8x128xf32>
    %22 = arith.addf %12, %21 : vector<2x8x8x128xf32>
    %23 = vector.extract_strided_slice %0 {offsets = [0, 2, 0, 0], sizes = [2, 1, 8, 128], strides = [1, 1, 1, 1]} : vector<2x4x8x128xf32> to vector<2x1x8x128xf32>
    %24 = vector.shape_cast %23 : vector<2x1x8x128xf32> to vector<2x8x128xf32>
    %25 = vector.shape_cast %24 : vector<2x8x128xf32> to vector<2x1x8x128xf32>
    %26 = vector.extract_strided_slice %1 {offsets = [0, 2, 0, 0], sizes = [2, 1, 8, 128], strides = [1, 1, 1, 1]} : vector<2x4x8x128xf32> to vector<2x1x8x128xf32>
    %27 = vector.shape_cast %26 : vector<2x1x8x128xf32> to vector<2x8x128xf32>
    %28 = vector.shape_cast %27 : vector<2x8x128xf32> to vector<2x8x1x128xf32>
    %29 = vector.broadcast %25 : vector<2x1x8x128xf32> to vector<2x8x8x128xf32>
    %30 = vector.broadcast %28 : vector<2x8x1x128xf32> to vector<2x8x8x128xf32>
    %31 = arith.mulf %29, %30 : vector<2x8x8x128xf32>
    %32 = arith.addf %22, %31 : vector<2x8x8x128xf32>
    %33 = vector.extract_strided_slice %0 {offsets = [0, 3, 0, 0], sizes = [2, 1, 8, 128], strides = [1, 1, 1, 1]} : vector<2x4x8x128xf32> to vector<2x1x8x128xf32>
    %34 = vector.shape_cast %33 : vector<2x1x8x128xf32> to vector<2x8x128xf32>
    %35 = vector.shape_cast %34 : vector<2x8x128xf32> to vector<2x1x8x128xf32>
    %36 = vector.extract_strided_slice %1 {offsets = [0, 3, 0, 0], sizes = [2, 1, 8, 128], strides = [1, 1, 1, 1]} : vector<2x4x8x128xf32> to vector<2x1x8x128xf32>
    %37 = vector.shape_cast %36 : vector<2x1x8x128xf32> to vector<2x8x128xf32>
    %38 = vector.shape_cast %37 : vector<2x8x128xf32> to vector<2x8x1x128xf32>
    %39 = vector.broadcast %35 : vector<2x1x8x128xf32> to vector<2x8x8x128xf32>
    %40 = vector.broadcast %38 : vector<2x8x1x128xf32> to vector<2x8x8x128xf32>
    %41 = arith.mulf %39, %40 : vector<2x8x8x128xf32>
    %42 = arith.addf %32, %41 : vector<2x8x8x128xf32>
    %cst = arith.constant 5.000000e-01 : f32
    %43 = vector.broadcast %cst : f32 to vector<2x8x8x128xf32>
    %44 = arith.mulf %42, %43 : vector<2x8x8x128xf32>
    %45 = vector.broadcast %3 : vector<2x8x8x1xf32> to vector<2x8x8x128xf32>
    %46 = arith.addf %44, %45 : vector<2x8x8x128xf32>
    %cst_15 = arith.constant dense<0xFF800000> : vector<2x8x128xf32>
    %47 = vector.multi_reduction <maximumf>, %46, %cst_15 [1] : vector<2x8x8x128xf32> to vector<2x8x128xf32>
    %48 = vector.shape_cast %47 : vector<2x8x128xf32> to vector<2x1x8x128xf32>
    %49 = vector.broadcast %48 : vector<2x1x8x128xf32> to vector<2x8x8x128xf32>
    %50 = arith.subf %46, %49 : vector<2x8x8x128xf32>
    %51 = math.exp %50 : vector<2x8x8x128xf32>
    %cst_16 = arith.constant dense<0.000000e+00> : vector<2x8x128xf32>
    %52 = vector.multi_reduction <add>, %51, %cst_16 [1] : vector<2x8x8x128xf32> to vector<2x8x128xf32>
    %53 = vector.shape_cast %52 : vector<2x8x128xf32> to vector<2x1x8x128xf32>
    %54 = tpu.reciprocal %53 {approx = true} : vector<2x1x8x128xf32> -> vector<2x1x8x128xf32>
    %55 = vector.broadcast %54 : vector<2x1x8x128xf32> to vector<2x8x8x128xf32>
    %56 = arith.mulf %51, %55 : vector<2x8x8x128xf32>
    %57 = vector.extract_strided_slice %56 {offsets = [0, 0, 0, 0], sizes = [2, 1, 8, 128], strides = [1, 1, 1, 1]} : vector<2x8x8x128xf32> to vector<2x1x8x128xf32>
    %58 = vector.shape_cast %57 : vector<2x1x8x128xf32> to vector<2x8x128xf32>
    %59 = vector.shape_cast %58 : vector<2x8x128xf32> to vector<2x1x8x128xf32>
    %60 = vector.extract_strided_slice %2 {offsets = [0, 0, 0, 0], sizes = [2, 4, 1, 128], strides = [1, 1, 1, 1]} : vector<2x4x8x128xf32> to vector<2x4x1x128xf32>
    %61 = vector.shape_cast %60 : vector<2x4x1x128xf32> to vector<2x4x128xf32>
    %62 = vector.shape_cast %61 : vector<2x4x128xf32> to vector<2x4x1x128xf32>
    %63 = vector.broadcast %59 : vector<2x1x8x128xf32> to vector<2x4x8x128xf32>
    %64 = vector.broadcast %62 : vector<2x4x1x128xf32> to vector<2x4x8x128xf32>
    %65 = arith.mulf %63, %64 : vector<2x4x8x128xf32>
    %66 = vector.extract_strided_slice %56 {offsets = [0, 1, 0, 0], sizes = [2, 1, 8, 128], strides = [1, 1, 1, 1]} : vector<2x8x8x128xf32> to vector<2x1x8x128xf32>
    %67 = vector.shape_cast %66 : vector<2x1x8x128xf32> to vector<2x8x128xf32>
    %68 = vector.shape_cast %67 : vector<2x8x128xf32> to vector<2x1x8x128xf32>
    %69 = vector.extract_strided_slice %2 {offsets = [0, 0, 1, 0], sizes = [2, 4, 1, 128], strides = [1, 1, 1, 1]} : vector<2x4x8x128xf32> to vector<2x4x1x128xf32>
    %70 = vector.shape_cast %69 : vector<2x4x1x128xf32> to vector<2x4x128xf32>
    %71 = vector.shape_cast %70 : vector<2x4x128xf32> to vector<2x4x1x128xf32>
    %72 = vector.broadcast %68 : vector<2x1x8x128xf32> to vector<2x4x8x128xf32>
    %73 = vector.broadcast %71 : vector<2x4x1x128xf32> to vector<2x4x8x128xf32>
    %74 = arith.mulf %72, %73 : vector<2x4x8x128xf32>
    %75 = arith.addf %65, %74 : vector<2x4x8x128xf32>
    %76 = vector.extract_strided_slice %56 {offsets = [0, 2, 0, 0], sizes = [2, 1, 8, 128], strides = [1, 1, 1, 1]} : vector<2x8x8x128xf32> to vector<2x1x8x128xf32>
    %77 = vector.shape_cast %76 : vector<2x1x8x128xf32> to vector<2x8x128xf32>
    %78 = vector.shape_cast %77 : vector<2x8x128xf32> to vector<2x1x8x128xf32>
    %79 = vector.extract_strided_slice %2 {offsets = [0, 0, 2, 0], sizes = [2, 4, 1, 128], strides = [1, 1, 1, 1]} : vector<2x4x8x128xf32> to vector<2x4x1x128xf32>
    %80 = vector.shape_cast %79 : vector<2x4x1x128xf32> to vector<2x4x128xf32>
    %81 = vector.shape_cast %80 : vector<2x4x128xf32> to vector<2x4x1x128xf32>
    %82 = vector.broadcast %78 : vector<2x1x8x128xf32> to vector<2x4x8x128xf32>
    %83 = vector.broadcast %81 : vector<2x4x1x128xf32> to vector<2x4x8x128xf32>
    %84 = arith.mulf %82, %83 : vector<2x4x8x128xf32>
    %85 = arith.addf %75, %84 : vector<2x4x8x128xf32>
    %86 = vector.extract_strided_slice %56 {offsets = [0, 3, 0, 0], sizes = [2, 1, 8, 128], strides = [1, 1, 1, 1]} : vector<2x8x8x128xf32> to vector<2x1x8x128xf32>
    %87 = vector.shape_cast %86 : vector<2x1x8x128xf32> to vector<2x8x128xf32>
    %88 = vector.shape_cast %87 : vector<2x8x128xf32> to vector<2x1x8x128xf32>
    %89 = vector.extract_strided_slice %2 {offsets = [0, 0, 3, 0], sizes = [2, 4, 1, 128], strides = [1, 1, 1, 1]} : vector<2x4x8x128xf32> to vector<2x4x1x128xf32>
    %90 = vector.shape_cast %89 : vector<2x4x1x128xf32> to vector<2x4x128xf32>
    %91 = vector.shape_cast %90 : vector<2x4x128xf32> to vector<2x4x1x128xf32>
    %92 = vector.broadcast %88 : vector<2x1x8x128xf32> to vector<2x4x8x128xf32>
    %93 = vector.broadcast %91 : vector<2x4x1x128xf32> to vector<2x4x8x128xf32>
    %94 = arith.mulf %92, %93 : vector<2x4x8x128xf32>
    %95 = arith.addf %85, %94 : vector<2x4x8x128xf32>
    %96 = vector.extract_strided_slice %56 {offsets = [0, 4, 0, 0], sizes = [2, 1, 8, 128], strides = [1, 1, 1, 1]} : vector<2x8x8x128xf32> to vector<2x1x8x128xf32>
    %97 = vector.shape_cast %96 : vector<2x1x8x128xf32> to vector<2x8x128xf32>
    %98 = vector.shape_cast %97 : vector<2x8x128xf32> to vector<2x1x8x128xf32>
    %99 = vector.extract_strided_slice %2 {offsets = [0, 0, 4, 0], sizes = [2, 4, 1, 128], strides = [1, 1, 1, 1]} : vector<2x4x8x128xf32> to vector<2x4x1x128xf32>
    %100 = vector.shape_cast %99 : vector<2x4x1x128xf32> to vector<2x4x128xf32>
    %101 = vector.shape_cast %100 : vector<2x4x128xf32> to vector<2x4x1x128xf32>
    %102 = vector.broadcast %98 : vector<2x1x8x128xf32> to vector<2x4x8x128xf32>
    %103 = vector.broadcast %101 : vector<2x4x1x128xf32> to vector<2x4x8x128xf32>
    %104 = arith.mulf %102, %103 : vector<2x4x8x128xf32>
    %105 = arith.addf %95, %104 : vector<2x4x8x128xf32>
    %106 = vector.extract_strided_slice %56 {offsets = [0, 5, 0, 0], sizes = [2, 1, 8, 128], strides = [1, 1, 1, 1]} : vector<2x8x8x128xf32> to vector<2x1x8x128xf32>
    %107 = vector.shape_cast %106 : vector<2x1x8x128xf32> to vector<2x8x128xf32>
    %108 = vector.shape_cast %107 : vector<2x8x128xf32> to vector<2x1x8x128xf32>
    %109 = vector.extract_strided_slice %2 {offsets = [0, 0, 5, 0], sizes = [2, 4, 1, 128], strides = [1, 1, 1, 1]} : vector<2x4x8x128xf32> to vector<2x4x1x128xf32>
    %110 = vector.shape_cast %109 : vector<2x4x1x128xf32> to vector<2x4x128xf32>
    %111 = vector.shape_cast %110 : vector<2x4x128xf32> to vector<2x4x1x128xf32>
    %112 = vector.broadcast %108 : vector<2x1x8x128xf32> to vector<2x4x8x128xf32>
    %113 = vector.broadcast %111 : vector<2x4x1x128xf32> to vector<2x4x8x128xf32>
    %114 = arith.mulf %112, %113 : vector<2x4x8x128xf32>
    %115 = arith.addf %105, %114 : vector<2x4x8x128xf32>
    %116 = vector.extract_strided_slice %56 {offsets = [0, 6, 0, 0], sizes = [2, 1, 8, 128], strides = [1, 1, 1, 1]} : vector<2x8x8x128xf32> to vector<2x1x8x128xf32>
    %117 = vector.shape_cast %116 : vector<2x1x8x128xf32> to vector<2x8x128xf32>
    %118 = vector.shape_cast %117 : vector<2x8x128xf32> to vector<2x1x8x128xf32>
    %119 = vector.extract_strided_slice %2 {offsets = [0, 0, 6, 0], sizes = [2, 4, 1, 128], strides = [1, 1, 1, 1]} : vector<2x4x8x128xf32> to vector<2x4x1x128xf32>
    %120 = vector.shape_cast %119 : vector<2x4x1x128xf32> to vector<2x4x128xf32>
    %121 = vector.shape_cast %120 : vector<2x4x128xf32> to vector<2x4x1x128xf32>
    %122 = vector.broadcast %118 : vector<2x1x8x128xf32> to vector<2x4x8x128xf32>
    %123 = vector.broadcast %121 : vector<2x4x1x128xf32> to vector<2x4x8x128xf32>
    %124 = arith.mulf %122, %123 : vector<2x4x8x128xf32>
    %125 = arith.addf %115, %124 : vector<2x4x8x128xf32>
    %126 = vector.extract_strided_slice %56 {offsets = [0, 7, 0, 0], sizes = [2, 1, 8, 128], strides = [1, 1, 1, 1]} : vector<2x8x8x128xf32> to vector<2x1x8x128xf32>
    %127 = vector.shape_cast %126 : vector<2x1x8x128xf32> to vector<2x8x128xf32>
    %128 = vector.shape_cast %127 : vector<2x8x128xf32> to vector<2x1x8x128xf32>
    %129 = vector.extract_strided_slice %2 {offsets = [0, 0, 7, 0], sizes = [2, 4, 1, 128], strides = [1, 1, 1, 1]} : vector<2x4x8x128xf32> to vector<2x4x1x128xf32>
    %130 = vector.shape_cast %129 : vector<2x4x1x128xf32> to vector<2x4x128xf32>
    %131 = vector.shape_cast %130 : vector<2x4x128xf32> to vector<2x4x1x128xf32>
    %132 = vector.broadcast %128 : vector<2x1x8x128xf32> to vector<2x4x8x128xf32>
    %133 = vector.broadcast %131 : vector<2x4x1x128xf32> to vector<2x4x8x128xf32>
    %134 = arith.mulf %132, %133 : vector<2x4x8x128xf32>
    %135 = arith.addf %125, %134 : vector<2x4x8x128xf32>
    %c0_17 = arith.constant 0 : index
    %c0_18 = arith.constant 0 : index
    %c0_19 = arith.constant 0 : index
    %c0_20 = arith.constant 0 : index
    %136 = vector.load %arg5[%c0_17, %c0_18, %c0_19, %c0_20] : memref<2x4x8x128xf32, #tpu.memory_space<vmem>>, vector<2x4x8x128xf32>
    tpu.vector_store %arg5[%c0_17, %c0_18, %c0_19, %c0_20], %135 {strides = array<i32>} : memref<2x4x8x128xf32, #tpu.memory_space<vmem>>, vector<2x4x8x128xf32>,
    return
  }
  func.func @transform_0(%arg0: i32) -> (i32, i32, i32, i32) {
    %c0_i32 = arith.constant 0 : i32
    %c0_i32_0 = arith.constant 0 : i32
    %c0_i32_1 = arith.constant 0 : i32
    %c0_i32_2 = arith.constant 0 : i32
    return %c0_i32, %c0_i32_0, %c0_i32_1, %arg0 : i32, i32, i32, i32
  }
  func.func @transform_1(%arg0: i32) -> (i32, i32, i32, i32) {
    %c0_i32 = arith.constant 0 : i32
    %c0_i32_0 = arith.constant 0 : i32
    %c0_i32_1 = arith.constant 0 : i32
    %c0_i32_2 = arith.constant 0 : i32
    return %c0_i32, %c0_i32_0, %c0_i32_1, %arg0 : i32, i32, i32, i32
  }
  func.func @transform_2(%arg0: i32) -> (i32, i32, i32, i32) {
    %c0_i32 = arith.constant 0 : i32
    %c0_i32_0 = arith.constant 0 : i32
    %c0_i32_1 = arith.constant 0 : i32
    %c0_i32_2 = arith.constant 0 : i32
    return %c0_i32, %c0_i32_0, %c0_i32_1, %arg0 : i32, i32, i32, i32
  }
  func.func @transform_3(%arg0: i32) -> (i32, i32, i32, i32) {
    %c0_i32 = arith.constant 0 : i32
    %c0_i32_0 = arith.constant 0 : i32
    %c0_i32_1 = arith.constant 0 : i32
    %c0_i32_2 = arith.constant 0 : i32
    %c0_i32_3 = arith.constant 0 : i32
    return %c0_i32, %c0_i32_0, %c0_i32_1, %c0_i32_2 : i32, i32, i32, i32
  }
  func.func @transform_4(%arg0: i32) -> (i32, i32, i32, i32) {
    %c0_i32 = arith.constant 0 : i32
    %c0_i32_0 = arith.constant 0 : i32
    %c0_i32_1 = arith.constant 0 : i32
    %c0_i32_2 = arith.constant 0 : i32
    return %c0_i32, %c0_i32_0, %c0_i32_1, %arg0 : i32, i32, i32, i32
  }
}

</mosaic_0001>

<llo_original>
// kernel: squeeze.12
$region0: #{squeeze.12}
  %s0 = inlined_call_operand.vmem [shape: f32[2,8,2,8,4], index: 0, kind: input, shape index: {}]
  %s1 = inlined_call_operand.vmem [shape: f32[16,2,8,4], index: 1, kind: output, shape index: {}]
  $region1: #{squeeze.12} parent=0
    #allocation0 [shape = 'u8[262144]{0}', space=vmem, size = 0x40000, scoped, tag = 'scoped mem for input reshape']
    %s3 = ssub.s32 4, 1
    %s4 = scalar_lea.vmem %s0, 126
    %v5 = vld [vmem:[%s4] sm:%s3]
    %s6 = scalar_lea.vmem [#allocation0], 504
    %7 = vst [vmem:[%s6] sm:%s3] %v5
    %s8 = scalar_lea.vmem %s0, 124
    %v9 = vld [vmem:[%s8] sm:%s3]
    %s10 = scalar_lea.vmem [#allocation0], 496
    %11 = vst [vmem:[%s10] sm:%s3] %v9
    %s12 = scalar_lea.vmem %s0, 122
    %v13 = vld [vmem:[%s12] sm:%s3]
    %s14 = scalar_lea.vmem [#allocation0], 488
    %15 = vst [vmem:[%s14] sm:%s3] %v13
    %s16 = scalar_lea.vmem %s0, 120
    %v17 = vld [vmem:[%s16] sm:%s3]
    %s18 = scalar_lea.vmem [#allocation0], 480
    %19 = vst [vmem:[%s18] sm:%s3] %v17
    %s20 = scalar_lea.vmem %s0, 118
    %v21 = vld [vmem:[%s20] sm:%s3]
    %s22 = scalar_lea.vmem [#allocation0], 472
    %23 = vst [vmem:[%s22] sm:%s3] %v21
    %s24 = scalar_lea.vmem %s0, 116
    %v25 = vld [vmem:[%s24] sm:%s3]
    %s26 = scalar_lea.vmem [#allocation0], 464
    %27 = vst [vmem:[%s26] sm:%s3] %v25
    %s28 = scalar_lea.vmem %s0, 114
    %v29 = vld [vmem:[%s28] sm:%s3]
    %s30 = scalar_lea.vmem [#allocation0], 456
    %31 = vst [vmem:[%s30] sm:%s3] %v29
    %s32 = scalar_lea.vmem %s0, 112
    %v33 = vld [vmem:[%s32] sm:%s3]
    %s34 = scalar_lea.vmem [#allocation0], 448
    %35 = vst [vmem:[%s34] sm:%s3] %v33
    %s36 = scalar_lea.vmem %s0, 110
    %v37 = vld [vmem:[%s36] sm:%s3]
    %s38 = scalar_lea.vmem [#allocation0], 440
    %39 = vst [vmem:[%s38] sm:%s3] %v37
    %s40 = scalar_lea.vmem %s0, 108
    %v41 = vld [vmem:[%s40] sm:%s3]
    %s42 = scalar_lea.vmem [#allocation0], 432
    %43 = vst [vmem:[%s42] sm:%s3] %v41
    %s44 = scalar_lea.vmem %s0, 106
    %v45 = vld [vmem:[%s44] sm:%s3]
    %s46 = scalar_lea.vmem [#allocation0], 424
    %47 = vst [vmem:[%s46] sm:%s3] %v45
    %s48 = scalar_lea.vmem %s0, 104
    %v49 = vld [vmem:[%s48] sm:%s3]
    %s50 = scalar_lea.vmem [#allocation0], 416
    %51 = vst [vmem:[%s50] sm:%s3] %v49
    %s52 = scalar_lea.vmem %s0, 102
    %v53 = vld [vmem:[%s52] sm:%s3]
    %s54 = scalar_lea.vmem [#allocation0], 408
    %55 = vst [vmem:[%s54] sm:%s3] %v53
    %s56 = scalar_lea.vmem %s0, 100
    %v57 = vld [vmem:[%s56] sm:%s3]
    %s58 = scalar_lea.vmem [#allocation0], 400
    %59 = vst [vmem:[%s58] sm:%s3] %v57
    %s60 = scalar_lea.vmem %s0, 98
    %v61 = vld [vmem:[%s60] sm:%s3]
    %s62 = scalar_lea.vmem [#allocation0], 392
    %63 = vst [vmem:[%s62] sm:%s3] %v61
    %s64 = scalar_lea.vmem %s0, 96
    %v65 = vld [vmem:[%s64] sm:%s3]
    %s66 = scalar_lea.vmem [#allocation0], 384
    %67 = vst [vmem:[%s66] sm:%s3] %v65
    %s68 = scalar_lea.vmem %s0, 94
    %v69 = vld [vmem:[%s68] sm:%s3]
    %s70 = scalar_lea.vmem [#allocation0], 376
    %71 = vst [vmem:[%s70] sm:%s3] %v69
    %s72 = scalar_lea.vmem %s0, 92
    %v73 = vld [vmem:[%s72] sm:%s3]
    %s74 = scalar_lea.vmem [#allocation0], 368
    %75 = vst [vmem:[%s74] sm:%s3] %v73
    %s76 = scalar_lea.vmem %s0, 90
    %v77 = vld [vmem:[%s76] sm:%s3]
    %s78 = scalar_lea.vmem [#allocation0], 360
    %79 = vst [vmem:[%s78] sm:%s3] %v77
    %s80 = scalar_lea.vmem %s0, 88
    %v81 = vld [vmem:[%s80] sm:%s3]
    %s82 = scalar_lea.vmem [#allocation0], 352
    %83 = vst [vmem:[%s82] sm:%s3] %v81
    %s84 = scalar_lea.vmem %s0, 86
    %v85 = vld [vmem:[%s84] sm:%s3]
    %s86 = scalar_lea.vmem [#allocation0], 344
    %87 = vst [vmem:[%s86] sm:%s3] %v85
    %s88 = scalar_lea.vmem %s0, 84
    %v89 = vld [vmem:[%s88] sm:%s3]
    %s90 = scalar_lea.vmem [#allocation0], 336
    %91 = vst [vmem:[%s90] sm:%s3] %v89
    %s92 = scalar_lea.vmem %s0, 82
    %v93 = vld [vmem:[%s92] sm:%s3]
    %s94 = scalar_lea.vmem [#allocation0], 328
    %95 = vst [vmem:[%s94] sm:%s3] %v93
    %s96 = scalar_lea.vmem %s0, 80
    %v97 = vld [vmem:[%s96] sm:%s3]
    %s98 = scalar_lea.vmem [#allocation0], 320
    %99 = vst [vmem:[%s98] sm:%s3] %v97
    %s100 = scalar_lea.vmem %s0, 78
    %v101 = vld [vmem:[%s100] sm:%s3]
    %s102 = scalar_lea.vmem [#allocation0], 312
    %103 = vst [vmem:[%s102] sm:%s3] %v101
    %s104 = scalar_lea.vmem %s0, 76
    %v105 = vld [vmem:[%s104] sm:%s3]
    %s106 = scalar_lea.vmem [#allocation0], 304
    %107 = vst [vmem:[%s106] sm:%s3] %v105
    %s108 = scalar_lea.vmem %s0, 74
    %v109 = vld [vmem:[%s108] sm:%s3]
    %s110 = scalar_lea.vmem [#allocation0], 296
    %111 = vst [vmem:[%s110] sm:%s3] %v109
    %s112 = scalar_lea.vmem %s0, 72
    %v113 = vld [vmem:[%s112] sm:%s3]
    %s114 = scalar_lea.vmem [#allocation0], 288
    %115 = vst [vmem:[%s114] sm:%s3] %v113
    %s116 = scalar_lea.vmem %s0, 70
    %v117 = vld [vmem:[%s116] sm:%s3]
    %s118 = scalar_lea.vmem [#allocation0], 280
    %119 = vst [vmem:[%s118] sm:%s3] %v117
    %s120 = scalar_lea.vmem %s0, 68
    %v121 = vld [vmem:[%s120] sm:%s3]
    %s122 = scalar_lea.vmem [#allocation0], 272
    %123 = vst [vmem:[%s122] sm:%s3] %v121
    %s124 = scalar_lea.vmem %s0, 66
    %v125 = vld [vmem:[%s124] sm:%s3]
    %s126 = scalar_lea.vmem [#allocation0], 264
    %127 = vst [vmem:[%s126] sm:%s3] %v125
    %s128 = scalar_lea.vmem %s0, 64
    %v129 = vld [vmem:[%s128] sm:%s3]
    %s130 = scalar_lea.vmem [#allocation0], 256
    %131 = vst [vmem:[%s130] sm:%s3] %v129
    %s132 = scalar_lea.vmem %s0, 62
    %v133 = vld [vmem:[%s132] sm:%s3]
    %s134 = scalar_lea.vmem [#allocation0], 248
    %135 = vst [vmem:[%s134] sm:%s3] %v133
    %s136 = scalar_lea.vmem %s0, 60
    %v137 = vld [vmem:[%s136] sm:%s3]
    %s138 = scalar_lea.vmem [#allocation0], 240
    %139 = vst [vmem:[%s138] sm:%s3] %v137
    %s140 = scalar_lea.vmem %s0, 58
    %v141 = vld [vmem:[%s140] sm:%s3]
    %s142 = scalar_lea.vmem [#allocation0], 232
    %143 = vst [vmem:[%s142] sm:%s3] %v141
    %s144 = scalar_lea.vmem %s0, 56
    %v145 = vld [vmem:[%s144] sm:%s3]
    %s146 = scalar_lea.vmem [#allocation0], 224
    %147 = vst [vmem:[%s146] sm:%s3] %v145
    %s148 = scalar_lea.vmem %s0, 54
    %v149 = vld [vmem:[%s148] sm:%s3]
    %s150 = scalar_lea.vmem [#allocation0], 216
    %151 = vst [vmem:[%s150] sm:%s3] %v149
    %s152 = scalar_lea.vmem %s0, 52
    %v153 = vld [vmem:[%s152] sm:%s3]
    %s154 = scalar_lea.vmem [#allocation0], 208
    %155 = vst [vmem:[%s154] sm:%s3] %v153
    %s156 = scalar_lea.vmem %s0, 50
    %v157 = vld [vmem:[%s156] sm:%s3]
    %s158 = scalar_lea.vmem [#allocation0], 200
    %159 = vst [vmem:[%s158] sm:%s3] %v157
    %s160 = scalar_lea.vmem %s0, 48
    %v161 = vld [vmem:[%s160] sm:%s3]
    %s162 = scalar_lea.vmem [#allocation0], 192
    %163 = vst [vmem:[%s162] sm:%s3] %v161
    %s164 = scalar_lea.vmem %s0, 46
    %v165 = vld [vmem:[%s164] sm:%s3]
    %s166 = scalar_lea.vmem [#allocation0], 184
    %167 = vst [vmem:[%s166] sm:%s3] %v165
    %s168 = scalar_lea.vmem %s0, 44
    %v169 = vld [vmem:[%s168] sm:%s3]
    %s170 = scalar_lea.vmem [#allocation0], 176
    %171 = vst [vmem:[%s170] sm:%s3] %v169
    %s172 = scalar_lea.vmem %s0, 42
    %v173 = vld [vmem:[%s172] sm:%s3]
    %s174 = scalar_lea.vmem [#allocation0], 168
    %175 = vst [vmem:[%s174] sm:%s3] %v173
    %s176 = scalar_lea.vmem %s0, 40
    %v177 = vld [vmem:[%s176] sm:%s3]
    %s178 = scalar_lea.vmem [#allocation0], 160
    %179 = vst [vmem:[%s178] sm:%s3] %v177
    %s180 = scalar_lea.vmem %s0, 38
    %v181 = vld [vmem:[%s180] sm:%s3]
    %s182 = scalar_lea.vmem [#allocation0], 152
    %183 = vst [vmem:[%s182] sm:%s3] %v181
    %s184 = scalar_lea.vmem %s0, 36
    %v185 = vld [vmem:[%s184] sm:%s3]
    %s186 = scalar_lea.vmem [#allocation0], 144
    %187 = vst [vmem:[%s186] sm:%s3] %v185
    %s188 = scalar_lea.vmem %s0, 34
    %v189 = vld [vmem:[%s188] sm:%s3]
    %s190 = scalar_lea.vmem [#allocation0], 136
    %191 = vst [vmem:[%s190] sm:%s3] %v189
    %s192 = scalar_lea.vmem %s0, 32
    %v193 = vld [vmem:[%s192] sm:%s3]
    %s194 = scalar_lea.vmem [#allocation0], 128
    %195 = vst [vmem:[%s194] sm:%s3] %v193
    %s196 = scalar_lea.vmem %s0, 30
    %v197 = vld [vmem:[%s196] sm:%s3]
    %s198 = scalar_lea.vmem [#allocation0], 120
    %199 = vst [vmem:[%s198] sm:%s3] %v197
    %s200 = scalar_lea.vmem %s0, 28
    %v201 = vld [vmem:[%s200] sm:%s3]
    %s202 = scalar_lea.vmem [#allocation0], 112
    %203 = vst [vmem:[%s202] sm:%s3] %v201
    %s204 = scalar_lea.vmem %s0, 26
    %v205 = vld [vmem:[%s204] sm:%s3]
    %s206 = scalar_lea.vmem [#allocation0], 104
    %207 = vst [vmem:[%s206] sm:%s3] %v205
    %s208 = scalar_lea.vmem %s0, 24
    %v209 = vld [vmem:[%s208] sm:%s3]
    %s210 = scalar_lea.vmem [#allocation0], 96
    %211 = vst [vmem:[%s210] sm:%s3] %v209
    %s212 = scalar_lea.vmem %s0, 22
    %v213 = vld [vmem:[%s212] sm:%s3]
    %s214 = scalar_lea.vmem [#allocation0], 88
    %215 = vst [vmem:[%s214] sm:%s3] %v213
    %s216 = scalar_lea.vmem %s0, 20
    %v217 = vld [vmem:[%s216] sm:%s3]
    %s218 = scalar_lea.vmem [#allocation0], 80
    %219 = vst [vmem:[%s218] sm:%s3] %v217
    %s220 = scalar_lea.vmem %s0, 18
    %v221 = vld [vmem:[%s220] sm:%s3]
    %s222 = scalar_lea.vmem [#allocation0], 72
    %223 = vst [vmem:[%s222] sm:%s3] %v221
    %s224 = scalar_lea.vmem %s0, 16
    %v225 = vld [vmem:[%s224] sm:%s3]
    %s226 = scalar_lea.vmem [#allocation0], 64
    %227 = vst [vmem:[%s226] sm:%s3] %v225
    %s228 = scalar_lea.vmem %s0, 14
    %v229 = vld [vmem:[%s228] sm:%s3]
    %s230 = scalar_lea.vmem [#allocation0], 56
    %231 = vst [vmem:[%s230] sm:%s3] %v229
    %s232 = scalar_lea.vmem %s0, 12
    %v233 = vld [vmem:[%s232] sm:%s3]
    %s234 = scalar_lea.vmem [#allocation0], 48
    %235 = vst [vmem:[%s234] sm:%s3] %v233
    %s236 = scalar_lea.vmem %s0, 10
    %v237 = vld [vmem:[%s236] sm:%s3]
    %s238 = scalar_lea.vmem [#allocation0], 40
    %239 = vst [vmem:[%s238] sm:%s3] %v237
    %s240 = scalar_lea.vmem %s0, 8
    %v241 = vld [vmem:[%s240] sm:%s3]
    %s242 = scalar_lea.vmem [#allocation0], 32
    %243 = vst [vmem:[%s242] sm:%s3] %v241
    %s244 = scalar_lea.vmem %s0, 6
    %v245 = vld [vmem:[%s244] sm:%s3]
    %s246 = scalar_lea.vmem [#allocation0], 24
    %247 = vst [vmem:[%s246] sm:%s3] %v245
    %s248 = scalar_lea.vmem %s0, 4
    %v249 = vld [vmem:[%s248] sm:%s3]
    %s250 = scalar_lea.vmem [#allocation0], 16
    %251 = vst [vmem:[%s250] sm:%s3] %v249
    %s252 = scalar_lea.vmem %s0, 2
    %v253 = vld [vmem:[%s252] sm:%s3]
    %s254 = scalar_lea.vmem [#allocation0], 8
    %255 = vst [vmem:[%s254] sm:%s3] %v253
    %v256 = vld [vmem:[%s0] sm:%s3]
    %257 = vst [vmem:[#allocation0] sm:%s3] %v256
    %v258 = vld [vmem:[#allocation0] ss:$8 sm:$0xf]
    %v259 = vld [vmem:[#allocation0] ss:$8 sm:$0xf0]
    %vm260 = vcmask 1047556
    %v261 = vsel %vm260, %v259, %v258
    %vm262 = vcmask 64512
    %263 = vst.msk [vmem:[%s1] sm:$0xff] %vm262, %v261
    %s264 = scalar_lea.vmem [#allocation0], 64
    %v265 = vld [vmem:[%s264] ss:$8 sm:$0xf]
    %s266 = scalar_lea.vmem [#allocation0], 64
    %v267 = vld [vmem:[%s266] ss:$8 sm:$0xf0]
    %vm268 = vcmask 1047556
    %v269 = vsel %vm268, %v267, %v265
    %vm270 = vcmask 64512
    %s271 = scalar_lea.vmem %s1, 8
    %272 = vst.msk [vmem:[%s271] sm:$0xff] %vm270, %v269
    %s273 = scalar_lea.vmem [#allocation0], 128
    %v274 = vld [vmem:[%s273] ss:$8 sm:$0xf]
    %s275 = scalar_lea.vmem [#allocation0], 128
    %v276 = vld [vmem:[%s275] ss:$8 sm:$0xf0]
    %vm277 = vcmask 1047556
    %v278 = vsel %vm277, %v276, %v274
    %vm279 = vcmask 64512
    %s280 = scalar_lea.vmem %s1, 16
    %281 = vst.msk [vmem:[%s280] sm:$0xff] %vm279, %v278
    %s282 = scalar_lea.vmem [#allocation0], 192
    %v283 = vld [vmem:[%s282] ss:$8 sm:$0xf]
    %s284 = scalar_lea.vmem [#allocation0], 192
    %v285 = vld [vmem:[%s284] ss:$8 sm:$0xf0]
    %vm286 = vcmask 1047556
    %v287 = vsel %vm286, %v285, %v283
    %vm288 = vcmask 64512
    %s289 = scalar_lea.vmem %s1, 24
    %290 = vst.msk [vmem:[%s289] sm:$0xff] %vm288, %v287
    %s291 = scalar_lea.vmem [#allocation0], 256
    %v292 = vld [vmem:[%s291] ss:$8 sm:$0xf]
    %s293 = scalar_lea.vmem [#allocation0], 256
    %v294 = vld [vmem:[%s293] ss:$8 sm:$0xf0]
    %vm295 = vcmask 1047556
    %v296 = vsel %vm295, %v294, %v292
    %vm297 = vcmask 64512
    %s298 = scalar_lea.vmem %s1, 32
    %299 = vst.msk [vmem:[%s298] sm:$0xff] %vm297, %v296
    %s300 = scalar_lea.vmem [#allocation0], 320
    %v301 = vld [vmem:[%s300] ss:$8 sm:$0xf]
    %s302 = scalar_lea.vmem [#allocation0], 320
    %v303 = vld [vmem:[%s302] ss:$8 sm:$0xf0]
    %vm304 = vcmask 1047556
    %v305 = vsel %vm304, %v303, %v301
    %vm306 = vcmask 64512
    %s307 = scalar_lea.vmem %s1, 40
    %308 = vst.msk [vmem:[%s307] sm:$0xff] %vm306, %v305
    %s309 = scalar_lea.vmem [#allocation0], 384
    %v310 = vld [vmem:[%s309] ss:$8 sm:$0xf]
    %s311 = scalar_lea.vmem [#allocation0], 384
    %v312 = vld [vmem:[%s311] ss:$8 sm:$0xf0]
    %vm313 = vcmask 1047556
    %v314 = vsel %vm313, %v312, %v310
    %vm315 = vcmask 64512
    %s316 = scalar_lea.vmem %s1, 48
    %317 = vst.msk [vmem:[%s316] sm:$0xff] %vm315, %v314
    %s318 = scalar_lea.vmem [#allocation0], 448
    %v319 = vld [vmem:[%s318] ss:$8 sm:$0xf]
    %s320 = scalar_lea.vmem [#allocation0], 448
    %v321 = vld [vmem:[%s320] ss:$8 sm:$0xf0]
    %vm322 = vcmask 1047556
    %v323 = vsel %vm322, %v321, %v319
    %vm324 = vcmask 64512
    %s325 = scalar_lea.vmem %s1, 56
    %326 = vst.msk [vmem:[%s325] sm:$0xff] %vm324, %v323
    %s327 = scalar_lea.vmem [#allocation0], 1
    %v328 = vld [vmem:[%s327] ss:$8 sm:$0xf]
    %s329 = scalar_lea.vmem [#allocation0], 1
    %v330 = vld [vmem:[%s329] ss:$8 sm:$0xf0]
    %vm331 = vcmask 1047556
    %v332 = vsel %vm331, %v330, %v328
    %333 = vrot.lane.b32.xlu0 %v332, 8
    %v334 = vpop.permute.xlu0 %333
    %vm335 = vcmask 130112
    %336 = vst.msk [vmem:[%s1] sm:$0xff] %vm335, %v334
    %s337 = scalar_lea.vmem [#allocation0], 257
    %v338 = vld [vmem:[%s337] ss:$8 sm:$0xf]
    %s339 = scalar_lea.vmem [#allocation0], 257
    %v340 = vld [vmem:[%s339] ss:$8 sm:$0xf0]
    %vm341 = vcmask 1047556
    %v342 = vsel %vm341, %v340, %v338
    %343 = vrot.lane.b32.xlu0 %v342, 8
    %v344 = vpop.permute.xlu0 %343
    %vm345 = vcmask 130112
    %s346 = scalar_lea.vmem %s1, 32
    %347 = vst.msk [vmem:[%s346] sm:$0xff] %vm345, %v344
    %s348 = scalar_lea.vmem [#allocation0], 65
    %v349 = vld [vmem:[%s348] ss:$8 sm:$0xf]
    %s350 = scalar_lea.vmem [#allocation0], 65
    %v351 = vld [vmem:[%s350] ss:$8 sm:$0xf0]
    %vm352 = vcmask 1047556
    %v353 = vsel %vm352, %v351, %v349
    %354 = vrot.lane.b32.xlu0 %v353, 8
    %v355 = vpop.permute.xlu0 %354
    %vm356 = vcmask 130112
    %s357 = scalar_lea.vmem %s1, 8
    %358 = vst.msk [vmem:[%s357] sm:$0xff] %vm356, %v355
    %s359 = scalar_lea.vmem [#allocation0], 321
    %v360 = vld [vmem:[%s359] ss:$8 sm:$0xf]
    %s361 = scalar_lea.vmem [#allocation0], 321
    %v362 = vld [vmem:[%s361] ss:$8 sm:$0xf0]
    %vm363 = vcmask 1047556
    %v364 = vsel %vm363, %v362, %v360
    %365 = vrot.lane.b32.xlu0 %v364, 8
    %v366 = vpop.permute.xlu0 %365
    %vm367 = vcmask 130112
    %s368 = scalar_lea.vmem %s1, 40
    %369 = vst.msk [vmem:[%s368] sm:$0xff] %vm367, %v366
    %s370 = scalar_lea.vmem [#allocation0], 129
    %v371 = vld [vmem:[%s370] ss:$8 sm:$0xf]
    %s372 = scalar_lea.vmem [#allocation0], 129
    %v373 = vld [vmem:[%s372] ss:$8 sm:$0xf0]
    %vm374 = vcmask 1047556
    %v375 = vsel %vm374, %v373, %v371
    %376 = vrot.lane.b32.xlu0 %v375, 8
    %v377 = vpop.permute.xlu0 %376
    %vm378 = vcmask 130112
    %s379 = scalar_lea.vmem %s1, 16
    %380 = vst.msk [vmem:[%s379] sm:$0xff] %vm378, %v377
    %s381 = scalar_lea.vmem [#allocation0], 385
    %v382 = vld [vmem:[%s381] ss:$8 sm:$0xf]
    %s383 = scalar_lea.vmem [#allocation0], 385
    %v384 = vld [vmem:[%s383] ss:$8 sm:$0xf0]
    %vm385 = vcmask 1047556
    %v386 = vsel %vm385, %v384, %v382
    %387 = vrot.lane.b32.xlu0 %v386, 8
    %v388 = vpop.permute.xlu0 %387
    %vm389 = vcmask 130112
    %s390 = scalar_lea.vmem %s1, 48
    %391 = vst.msk [vmem:[%s390] sm:$0xff] %vm389, %v388
    %s392 = scalar_lea.vmem [#allocation0], 193
    %v393 = vld [vmem:[%s392] ss:$8 sm:$0xf]
    %s394 = scalar_lea.vmem [#allocation0], 193
    %v395 = vld [vmem:[%s394] ss:$8 sm:$0xf0]
    %vm396 = vcmask 1047556
    %v397 = vsel %vm396, %v395, %v393
    %398 = vrot.lane.b32.xlu0 %v397, 8
    %v399 = vpop.permute.xlu0 %398
    %vm400 = vcmask 130112
    %s401 = scalar_lea.vmem %s1, 24
    %402 = vst.msk [vmem:[%s401] sm:$0xff] %vm400, %v399
    %s403 = scalar_lea.vmem [#allocation0], 449
    %v404 = vld [vmem:[%s403] ss:$8 sm:$0xf]
    %s405 = scalar_lea.vmem [#allocation0], 449
    %v406 = vld [vmem:[%s405] ss:$8 sm:$0xf0]
    %vm407 = vcmask 1047556
    %v408 = vsel %vm407, %v406, %v404
    %409 = vrot.lane.b32.xlu0 %v408, 8
    %v410 = vpop.permute.xlu0 %409
    %vm411 = vcmask 130112
    %s412 = scalar_lea.vmem %s1, 56
    %413 = vst.msk [vmem:[%s412] sm:$0xff] %vm411, %v410

// kernel: multi_scale_attention_forward.1
$region0: #{multi_scale_attention_forward.1}
  #allocation0 [shape = 'u32[]', space=smem, size = 0x4, offset = 0x4, fixed_abs, tag = 'smem constant byte address 0x4 - core index']
  #allocation1 [shape = 'u32[72,128]{1,0:T(1,128)}', space=vmem, size = 0x9000, scoped, tag = 'internal scratch']
  %s0 = inlined_call_operand.vmem [shape: f32[2,4,8,256], index: 0, kind: input, shape index: {}]
  %s1 = inlined_call_operand.vmem [shape: f32[2,4,8,256], index: 1, kind: input, shape index: {}]
  %s2 = inlined_call_operand.vmem [shape: f32[2,4,8,256], index: 2, kind: input, shape index: {}]
  %s3 = inlined_call_operand.vmem [shape: f32[2,8,8,1], index: 3, kind: input, shape index: {}]
  %s4 = inlined_call_operand.vmem [shape: f32[2,4,8,256], index: 4, kind: output, shape index: {}]
  %s5 = sld [smem:[#allocation0]]
  $region197: #{multi_scale_attention_forward.1} parent=0
    _
  %s7 = ssub.s32 1, %s5
  %s8 = scalar_select 0, %s7, %s5
  $region1: #{multi_scale_attention_forward.1} parent=0
    #allocation2 [shape = 'u8[65536]{0}', space=vmem, size = 0x10000, scoped, tag = 'input window, operand 0']
    #allocation3 [shape = 'u8[65536]{0}', space=vmem, size = 0x10000, scoped, tag = 'input window, operand 1']
    #allocation4 [shape = 'u8[65536]{0}', space=vmem, size = 0x10000, scoped, tag = 'input window, operand 2']
    #allocation5 [shape = 'u8[65536]{0}', space=vmem, size = 0x10000, scoped, tag = 'output window, operand 0']
    loop: start=0, step=1, limit=4
    $region2: #{multi_scale_attention_forward.1} parent=1 // loop_pre_header
      _
    $region3: #{multi_scale_attention_forward.1} parent=1 // loop_header
      %s10 = sphi 0, %s14
      %p11 = scmp.ge.s32.totalorder %s10, 4
      %s20 = sphi 0, %s22
      %s23 = sphi 0, %s20
      %s24 = sphi 0, %s23
      %s40 = sphi 0, %s24
      %s46 = sphi 0, %s48
      %s49 = sphi 0, %s46
      %s50 = sphi 0, %s49
      %s66 = sphi 0, %s50
      %s72 = sphi 0, %s74
      %s75 = sphi 0, %s72
      %s76 = sphi 0, %s75
      %s92 = sphi 0, %s76
      %s96 = sphi 0, %s96
      %s98 = sphi 0, %s96
      %s99 = sphi 0, %s98
      %s113 = sphi 0, %s99
      %s119 = sphi 0, %s121
      %s122 = sphi 0, %s119
      %s123 = sphi 0, %s122
      %s139 = sphi 0, %s123
    $region4: #{multi_scale_attention_forward.1} parent=1 // loop_header_branch
      %13 = sbr.rel (%p11) target = $region8
    $region5: #{multi_scale_attention_forward.1} parent=1 // loop_body
      %s15 = ssub.s32 %s10, 1
      %s16 = ssub.s32 %s10, 2
      %s17 = sadd.s32 %s10, 1
      %s18 = ssub.s32 %s10, %s17
      %p19 = scmp.eq.s32.totalorder %s18, 0
      %s21 = sadd.s32 %s20, 1
      %s22 = scalar_select %p19, %s20, %s21
      %p25 = pneg %p19
      %p26 = scmp.eq.s32.totalorder %s10, 1
      %p27 = por %p25, %p26
      %p28 = scmp.ne.s32.totalorder %s20, %s23
      %p29 = scmp.eq.s32.totalorder %s10, 0
      %p30 = por %p28, %p29
      %p31 = scmp.ne.s32.totalorder %s20, %s23
      %p32 = scmp.eq.s32.totalorder %s15, 1
      %p33 = por %p31, %p32
      %p34 = scmp.ne.s32.totalorder %s23, %s24
      %p35 = scmp.eq.s32.totalorder %s15, 0
      %p36 = por %p34, %p35
      %p37 = scmp.ne.s32.totalorder %s23, %s24
      %p38 = scmp.eq.s32.totalorder %s16, 1
      %p39 = por %p37, %p38
      %p41 = scmp.ne.s32.totalorder %s24, %s40
      %p42 = scmp.eq.s32.totalorder %s16, 0
      %p43 = por %p41, %p42
      %s44 = ssub.s32 %s10, %s17
      %p45 = scmp.eq.s32.totalorder %s44, 0
      %s47 = sadd.s32 %s46, 1
      %s48 = scalar_select %p45, %s46, %s47
      %p51 = pneg %p45
      %p52 = scmp.eq.s32.totalorder %s10, 1
      %p53 = por %p51, %p52
      %p54 = scmp.ne.s32.totalorder %s46, %s49
      %p55 = scmp.eq.s32.totalorder %s10, 0
      %p56 = por %p54, %p55
      %p57 = scmp.ne.s32.totalorder %s46, %s49
      %p58 = scmp.eq.s32.totalorder %s15, 1
      %p59 = por %p57, %p58
      %p60 = scmp.ne.s32.totalorder %s49, %s50
      %p61 = scmp.eq.s32.totalorder %s15, 0
      %p62 = por %p60, %p61
      %p63 = scmp.ne.s32.totalorder %s49, %s50
      %p64 = scmp.eq.s32.totalorder %s16, 1
      %p65 = por %p63, %p64
      %p67 = scmp.ne.s32.totalorder %s50, %s66
      %p68 = scmp.eq.s32.totalorder %s16, 0
      %p69 = por %p67, %p68
      %s70 = ssub.s32 %s10, %s17
      %p71 = scmp.eq.s32.totalorder %s70, 0
      %s73 = sadd.s32 %s72, 1
      %s74 = scalar_select %p71, %s72, %s73
      %p77 = pneg %p71
      %p78 = scmp.eq.s32.totalorder %s10, 1
      %p79 = por %p77, %p78
      %p80 = scmp.ne.s32.totalorder %s72, %s75
      %p81 = scmp.eq.s32.totalorder %s10, 0
      %p82 = por %p80, %p81
      %p83 = scmp.ne.s32.totalorder %s72, %s75
      %p84 = scmp.eq.s32.totalorder %s15, 1
      %p85 = por %p83, %p84
      %p86 = scmp.ne.s32.totalorder %s75, %s76
      %p87 = scmp.eq.s32.totalorder %s15, 0
      %p88 = por %p86, %p87
      %p89 = scmp.ne.s32.totalorder %s75, %s76
      %p90 = scmp.eq.s32.totalorder %s16, 1
      %p91 = por %p89, %p90
      %p93 = scmp.ne.s32.totalorder %s76, %s92
      %p94 = scmp.eq.s32.totalorder %s16, 0
      %p95 = por %p93, %p94
      %s97 = sadd.s32 %s96, 1
      %p100 = scmp.eq.s32.totalorder %s10, 1
      %p101 = scmp.ne.s32.totalorder %s96, %s98
      %p102 = scmp.eq.s32.totalorder %s10, 0
      %p103 = por %p101, %p102
      %p104 = scmp.ne.s32.totalorder %s96, %s98
      %p105 = scmp.eq.s32.totalorder %s15, 1
      %p106 = por %p104, %p105
      %p107 = scmp.ne.s32.totalorder %s98, %s99
      %p108 = scmp.eq.s32.totalorder %s15, 0
      %p109 = por %p107, %p108
      %p110 = scmp.ne.s32.totalorder %s98, %s99
      %p111 = scmp.eq.s32.totalorder %s16, 1
      %p112 = por %p110, %p111
      %p114 = scmp.ne.s32.totalorder %s99, %s113
      %p115 = scmp.eq.s32.totalorder %s16, 0
      %p116 = por %p114, %p115
      %s117 = ssub.s32 %s10, %s17
      %p118 = scmp.eq.s32.totalorder %s117, 0
      %s120 = sadd.s32 %s119, 1
      %s121 = scalar_select %p118, %s119, %s120
      %p124 = pneg %p118
      %p125 = scmp.eq.s32.totalorder %s10, 1
      %p126 = por %p124, %p125
      %p127 = scmp.ne.s32.totalorder %s119, %s122
      %p128 = scmp.eq.s32.totalorder %s10, 0
      %p129 = por %p127, %p128
      %p130 = scmp.ne.s32.totalorder %s119, %s122
      %p131 = scmp.eq.s32.totalorder %s15, 1
      %p132 = por %p130, %p131
      %p133 = scmp.ne.s32.totalorder %s122, %s123
      %p134 = scmp.eq.s32.totalorder %s15, 0
      %p135 = por %p133, %p134
      %p136 = scmp.ne.s32.totalorder %s122, %s123
      %p137 = scmp.eq.s32.totalorder %s16, 1
      %p138 = por %p136, %p137
      %p140 = scmp.ne.s32.totalorder %s123, %s139
      %p141 = scmp.eq.s32.totalorder %s16, 0
      %p142 = por %p140, %p141
      %p143 = scmp.le.s32.totalorder 1, %s10
      %p144 = scmp.lt.s32.totalorder %s10, 3
      %p145 = pnand %p143, %p144
      %p146 = pneg %p145
      // Predicated region
      $region9: #{multi_scale_attention_forward.1} parent=5 // pred_check
        _
      $region10: #{multi_scale_attention_forward.1} parent=5 // pred_check_branch
        %148 = sbr.rel (%p145) target = $region12
      $region11: #{multi_scale_attention_forward.1} parent=5 // pred_region
        %s149 = ssub.s32 %s10, 1
        // Predicated region
        $region13: #{multi_scale_attention_forward.1} parent=11 // pred_check
          %p150 = pneg %p109
        $region14: #{multi_scale_attention_forward.1} parent=11 // pred_check_branch
          %152 = sbr.rel (%p150) target = $region16
        $region15: #{multi_scale_attention_forward.1} parent=11 // pred_region
          _
        $region16: #{multi_scale_attention_forward.1} parent=11 // pred_fallthru
          _
      $region12: #{multi_scale_attention_forward.1} parent=5 // pred_fallthru
        _
      %p153 = scmp.lt.s32.totalorder %s10, 2
      // Predicated region
      $region17: #{multi_scale_attention_forward.1} parent=5 // pred_check
        %p154 = pneg %p153
      $region18: #{multi_scale_attention_forward.1} parent=5 // pred_check_branch
        %156 = sbr.rel (%p154) target = $region20
      $region19: #{multi_scale_attention_forward.1} parent=5 // pred_region
        // Predicated region
        $region21: #{multi_scale_attention_forward.1} parent=19 // pred_check
          %p157 = pneg %p30
        $region22: #{multi_scale_attention_forward.1} parent=19 // pred_check_branch
          %159 = sbr.rel (%p157) target = $region24
        $region23: #{multi_scale_attention_forward.1} parent=19 // pred_region
          %s160 = sand.u32 %s20, 1
          %s161 = sand.u32 %s20, 1
          %s162 = smul.addr %s161, 64
          %s163 = scalar_lea.vmem [#allocation2], %s162
          %s164 = smul.addr %s10, 8
          %s165 = scalar_lea.vmem %s0, %s164
          // Predicated region
          $region25: #{multi_scale_attention_forward.1} parent=23 // pred_check
            _
          $region26: #{multi_scale_attention_forward.1} parent=23 // pred_check_branch
            %167 = sbr.rel (0) target = $region28
          $region27: #{multi_scale_attention_forward.1} parent=23 // pred_region
            // Predicated region
            $region29: #{multi_scale_attention_forward.1} parent=27 // pred_check
              _
            $region30: #{multi_scale_attention_forward.1} parent=27 // pred_check_branch
              %169 = sbr.rel (0) target = $region32
            $region31: #{multi_scale_attention_forward.1} parent=27 // pred_region
              // Predicated region
              $region44: #{multi_scale_attention_forward.1} parent=31 // pred_check
                _
              $region45: #{multi_scale_attention_forward.1} parent=31 // pred_check_branch
                %199 = sbr.rel (0) target = $region47
              $region46: #{multi_scale_attention_forward.1} parent=31 // pred_region
                loop: start=0, step=1, limit=1
                $region48: #{multi_scale_attention_forward.1} parent=46 // loop_pre_header
                  _
                $region49: #{multi_scale_attention_forward.1} parent=46 // loop_header
                  %s201 = sphi 0, %s205
                  %p202 = scmp.ge.s32.totalorder %s201, 1
                  %s206 = sphi %s165, %s165
                  %s207 = sphi %s163, %s163
                $region50: #{multi_scale_attention_forward.1} parent=46 // loop_header_branch
                  %204 = sbr.rel (%p202) target = $region54
                $region51: #{multi_scale_attention_forward.1} parent=46 // loop_body
                  %v208 = vld [vmem:[%s206] sm:$0xff]
                  %209 = vst [vmem:[%s207] sm:$0xff] %v208
                  %v210 = vld [vmem:[%s206 + $0x10] sm:$0xff]
                  %211 = vst [vmem:[%s207 + $0x8] sm:$0xff] %v210
                  %v212 = vld [vmem:[%s206 + $0x20] sm:$0xff]
                  %213 = vst [vmem:[%s207 + $0x10] sm:$0xff] %v212
                  %v214 = vld [vmem:[%s206 + $0x30] sm:$0xff]
                  %215 = vst [vmem:[%s207 + $0x18] sm:$0xff] %v214
                  %v216 = vld [vmem:[%s206 + $0x40] sm:$0xff]
                  %217 = vst [vmem:[%s207 + $0x20] sm:$0xff] %v216
                  %v218 = vld [vmem:[%s206 + $0x50] sm:$0xff]
                  %219 = vst [vmem:[%s207 + $0x28] sm:$0xff] %v218
                  %v220 = vld [vmem:[%s206 + $0x60] sm:$0xff]
                  %221 = vst [vmem:[%s207 + $0x30] sm:$0xff] %v220
                  %v222 = vld [vmem:[%s206 + $0x70] sm:$0xff]
                  %223 = vst [vmem:[%s207 + $0x38] sm:$0xff] %v222
                $region52: #{multi_scale_attention_forward.1} parent=46 // loop_footer
                  %s205 = sadd.s32 1, %s201
                $region53: #{multi_scale_attention_forward.1} parent=46 // loop_footer_branch
                  %200 = sbr.rel target = $region49
                $region54: #{multi_scale_attention_forward.1} parent=46 // loop_exit
                  _
              $region47: #{multi_scale_attention_forward.1} parent=31 // pred_fallthru
                _
              // Predicated region
              $region55: #{multi_scale_attention_forward.1} parent=31 // pred_check
                _
              $region56: #{multi_scale_attention_forward.1} parent=31 // pred_check_branch
                %225 = sbr.rel target = $region58
              $region57: #{multi_scale_attention_forward.1} parent=31 // pred_region
                _
              $region58: #{multi_scale_attention_forward.1} parent=31 // pred_fallthru
                _
            $region32: #{multi_scale_attention_forward.1} parent=27 // pred_fallthru
              _
            // Predicated region
            $region33: #{multi_scale_attention_forward.1} parent=27 // pred_check
              _
            $region34: #{multi_scale_attention_forward.1} parent=27 // pred_check_branch
              %171 = sbr.rel target = $region36
            $region35: #{multi_scale_attention_forward.1} parent=27 // pred_region
              %s173 = ssub.s32 256, 1
              loop: start=0, step=1, limit=1
              $region37: #{multi_scale_attention_forward.1} parent=35 // loop_pre_header
                _
              $region38: #{multi_scale_attention_forward.1} parent=35 // loop_header
                %s175 = sphi 0, %s179
                %p176 = scmp.ge.s32.totalorder %s175, 1
                %s180 = sphi %s165, %s165
                %s181 = sphi %s163, %s163
              $region39: #{multi_scale_attention_forward.1} parent=35 // loop_header_branch
                %178 = sbr.rel (%p176) target = $region43
              $region40: #{multi_scale_attention_forward.1} parent=35 // loop_body
                %v182 = vld [vmem:[%s180] sm:%s173]
                %183 = vst [vmem:[%s181] sm:%s173] %v182
                %v184 = vld [vmem:[%s180 + $0x10] sm:%s173]
                %185 = vst [vmem:[%s181 + $0x8] sm:%s173] %v184
                %v186 = vld [vmem:[%s180 + $0x20] sm:%s173]
                %187 = vst [vmem:[%s181 + $0x10] sm:%s173] %v186
                %v188 = vld [vmem:[%s180 + $0x30] sm:%s173]
                %189 = vst [vmem:[%s181 + $0x18] sm:%s173] %v188
                %v190 = vld [vmem:[%s180 + $0x40] sm:%s173]
                %191 = vst [vmem:[%s181 + $0x20] sm:%s173] %v190
                %v192 = vld [vmem:[%s180 + $0x50] sm:%s173]
                %193 = vst [vmem:[%s181 + $0x28] sm:%s173] %v192
                %v194 = vld [vmem:[%s180 + $0x60] sm:%s173]
                %195 = vst [vmem:[%s181 + $0x30] sm:%s173] %v194
                %v196 = vld [vmem:[%s180 + $0x70] sm:%s173]
                %197 = vst [vmem:[%s181 + $0x38] sm:%s173] %v196
              $region41: #{multi_scale_attention_forward.1} parent=35 // loop_footer
                %s179 = sadd.s32 1, %s175
              $region42: #{multi_scale_attention_forward.1} parent=35 // loop_footer_branch
                %174 = sbr.rel target = $region38
              $region43: #{multi_scale_attention_forward.1} parent=35 // loop_exit
                _
            $region36: #{multi_scale_attention_forward.1} parent=27 // pred_fallthru
              _
          $region28: #{multi_scale_attention_forward.1} parent=23 // pred_fallthru
            _
          %226 = vnop
        $region24: #{multi_scale_attention_forward.1} parent=19 // pred_fallthru
          _
        // Predicated region
        $region59: #{multi_scale_attention_forward.1} parent=19 // pred_check
          %p227 = pneg %p56
        $region60: #{multi_scale_attention_forward.1} parent=19 // pred_check_branch
          %229 = sbr.rel (%p227) target = $region62
        $region61: #{multi_scale_attention_forward.1} parent=19 // pred_region
          %s230 = sand.u32 %s46, 1
          %s231 = sand.u32 %s46, 1
          %s232 = smul.addr %s231, 64
          %s233 = scalar_lea.vmem [#allocation3], %s232
          %s234 = smul.addr %s10, 8
          %s235 = scalar_lea.vmem %s1, %s234
          // Predicated region
          $region63: #{multi_scale_attention_forward.1} parent=61 // pred_check
            _
          $region64: #{multi_scale_attention_forward.1} parent=61 // pred_check_branch
            %237 = sbr.rel (0) target = $region66
          $region65: #{multi_scale_attention_forward.1} parent=61 // pred_region
            // Predicated region
            $region67: #{multi_scale_attention_forward.1} parent=65 // pred_check
              _
            $region68: #{multi_scale_attention_forward.1} parent=65 // pred_check_branch
              %239 = sbr.rel (0) target = $region70
            $region69: #{multi_scale_attention_forward.1} parent=65 // pred_region
              // Predicated region
              $region82: #{multi_scale_attention_forward.1} parent=69 // pred_check
                _
              $region83: #{multi_scale_attention_forward.1} parent=69 // pred_check_branch
                %269 = sbr.rel (0) target = $region85
              $region84: #{multi_scale_attention_forward.1} parent=69 // pred_region
                loop: start=0, step=1, limit=1
                $region86: #{multi_scale_attention_forward.1} parent=84 // loop_pre_header
                  _
                $region87: #{multi_scale_attention_forward.1} parent=84 // loop_header
                  %s271 = sphi 0, %s275
                  %p272 = scmp.ge.s32.totalorder %s271, 1
                  %s276 = sphi %s235, %s235
                  %s277 = sphi %s233, %s233
                $region88: #{multi_scale_attention_forward.1} parent=84 // loop_header_branch
                  %274 = sbr.rel (%p272) target = $region92
                $region89: #{multi_scale_attention_forward.1} parent=84 // loop_body
                  %v278 = vld [vmem:[%s276] sm:$0xff]
                  %279 = vst [vmem:[%s277] sm:$0xff] %v278
                  %v280 = vld [vmem:[%s276 + $0x10] sm:$0xff]
                  %281 = vst [vmem:[%s277 + $0x8] sm:$0xff] %v280
                  %v282 = vld [vmem:[%s276 + $0x20] sm:$0xff]
                  %283 = vst [vmem:[%s277 + $0x10] sm:$0xff] %v282
                  %v284 = vld [vmem:[%s276 + $0x30] sm:$0xff]
                  %285 = vst [vmem:[%s277 + $0x18] sm:$0xff] %v284
                  %v286 = vld [vmem:[%s276 + $0x40] sm:$0xff]
                  %287 = vst [vmem:[%s277 + $0x20] sm:$0xff] %v286
                  %v288 = vld [vmem:[%s276 + $0x50] sm:$0xff]
                  %289 = vst [vmem:[%s277 + $0x28] sm:$0xff] %v288
                  %v290 = vld [vmem:[%s276 + $0x60] sm:$0xff]
                  %291 = vst [vmem:[%s277 + $0x30] sm:$0xff] %v290
                  %v292 = vld [vmem:[%s276 + $0x70] sm:$0xff]
                  %293 = vst [vmem:[%s277 + $0x38] sm:$0xff] %v292
                $region90: #{multi_scale_attention_forward.1} parent=84 // loop_footer
                  %s275 = sadd.s32 1, %s271
                $region91: #{multi_scale_attention_forward.1} parent=84 // loop_footer_branch
                  %270 = sbr.rel target = $region87
                $region92: #{multi_scale_attention_forward.1} parent=84 // loop_exit
                  _
              $region85: #{multi_scale_attention_forward.1} parent=69 // pred_fallthru
                _
              // Predicated region
              $region93: #{multi_scale_attention_forward.1} parent=69 // pred_check
                _
              $region94: #{multi_scale_attention_forward.1} parent=69 // pred_check_branch
                %295 = sbr.rel target = $region96
              $region95: #{multi_scale_attention_forward.1} parent=69 // pred_region
                _
              $region96: #{multi_scale_attention_forward.1} parent=69 // pred_fallthru
                _
            $region70: #{multi_scale_attention_forward.1} parent=65 // pred_fallthru
              _
            // Predicated region
            $region71: #{multi_scale_attention_forward.1} parent=65 // pred_check
              _
            $region72: #{multi_scale_attention_forward.1} parent=65 // pred_check_branch
              %241 = sbr.rel target = $region74
            $region73: #{multi_scale_attention_forward.1} parent=65 // pred_region
              %s243 = ssub.s32 256, 1
              loop: start=0, step=1, limit=1
              $region75: #{multi_scale_attention_forward.1} parent=73 // loop_pre_header
                _
              $region76: #{multi_scale_attention_forward.1} parent=73 // loop_header
                %s245 = sphi 0, %s249
                %p246 = scmp.ge.s32.totalorder %s245, 1
                %s250 = sphi %s235, %s235
                %s251 = sphi %s233, %s233
              $region77: #{multi_scale_attention_forward.1} parent=73 // loop_header_branch
                %248 = sbr.rel (%p246) target = $region81
              $region78: #{multi_scale_attention_forward.1} parent=73 // loop_body
                %v252 = vld [vmem:[%s250] sm:%s243]
                %253 = vst [vmem:[%s251] sm:%s243] %v252
                %v254 = vld [vmem:[%s250 + $0x10] sm:%s243]
                %255 = vst [vmem:[%s251 + $0x8] sm:%s243] %v254
                %v256 = vld [vmem:[%s250 + $0x20] sm:%s243]
                %257 = vst [vmem:[%s251 + $0x10] sm:%s243] %v256
                %v258 = vld [vmem:[%s250 + $0x30] sm:%s243]
                %259 = vst [vmem:[%s251 + $0x18] sm:%s243] %v258
                %v260 = vld [vmem:[%s250 + $0x40] sm:%s243]
                %261 = vst [vmem:[%s251 + $0x20] sm:%s243] %v260
                %v262 = vld [vmem:[%s250 + $0x50] sm:%s243]
                %263 = vst [vmem:[%s251 + $0x28] sm:%s243] %v262
                %v264 = vld [vmem:[%s250 + $0x60] sm:%s243]
                %265 = vst [vmem:[%s251 + $0x30] sm:%s243] %v264
                %v266 = vld [vmem:[%s250 + $0x70] sm:%s243]
                %267 = vst [vmem:[%s251 + $0x38] sm:%s243] %v266
              $region79: #{multi_scale_attention_forward.1} parent=73 // loop_footer
                %s249 = sadd.s32 1, %s245
              $region80: #{multi_scale_attention_forward.1} parent=73 // loop_footer_branch
                %244 = sbr.rel target = $region76
              $region81: #{multi_scale_attention_forward.1} parent=73 // loop_exit
                _
            $region74: #{multi_scale_attention_forward.1} parent=65 // pred_fallthru
              _
          $region66: #{multi_scale_attention_forward.1} parent=61 // pred_fallthru
            _
          %296 = vnop
        $region62: #{multi_scale_attention_forward.1} parent=19 // pred_fallthru
          _
        // Predicated region
        $region97: #{multi_scale_attention_forward.1} parent=19 // pred_check
          %p297 = pneg %p82
        $region98: #{multi_scale_attention_forward.1} parent=19 // pred_check_branch
          %299 = sbr.rel (%p297) target = $region100
        $region99: #{multi_scale_attention_forward.1} parent=19 // pred_region
          %s300 = sand.u32 %s72, 1
          %s301 = sand.u32 %s72, 1
          %s302 = smul.addr %s301, 64
          %s303 = scalar_lea.vmem [#allocation4], %s302
          %s304 = smul.addr %s10, 8
          %s305 = scalar_lea.vmem %s2, %s304
          // Predicated region
          $region101: #{multi_scale_attention_forward.1} parent=99 // pred_check
            _
          $region102: #{multi_scale_attention_forward.1} parent=99 // pred_check_branch
            %307 = sbr.rel (0) target = $region104
          $region103: #{multi_scale_attention_forward.1} parent=99 // pred_region
            // Predicated region
            $region105: #{multi_scale_attention_forward.1} parent=103 // pred_check
              _
            $region106: #{multi_scale_attention_forward.1} parent=103 // pred_check_branch
              %309 = sbr.rel (0) target = $region108
            $region107: #{multi_scale_attention_forward.1} parent=103 // pred_region
              // Predicated region
              $region120: #{multi_scale_attention_forward.1} parent=107 // pred_check
                _
              $region121: #{multi_scale_attention_forward.1} parent=107 // pred_check_branch
                %339 = sbr.rel (0) target = $region123
              $region122: #{multi_scale_attention_forward.1} parent=107 // pred_region
                loop: start=0, step=1, limit=1
                $region124: #{multi_scale_attention_forward.1} parent=122 // loop_pre_header
                  _
                $region125: #{multi_scale_attention_forward.1} parent=122 // loop_header
                  %s341 = sphi 0, %s345
                  %p342 = scmp.ge.s32.totalorder %s341, 1
                  %s346 = sphi %s305, %s305
                  %s347 = sphi %s303, %s303
                $region126: #{multi_scale_attention_forward.1} parent=122 // loop_header_branch
                  %344 = sbr.rel (%p342) target = $region130
                $region127: #{multi_scale_attention_forward.1} parent=122 // loop_body
                  %v348 = vld [vmem:[%s346] sm:$0xff]
                  %349 = vst [vmem:[%s347] sm:$0xff] %v348
                  %v350 = vld [vmem:[%s346 + $0x10] sm:$0xff]
                  %351 = vst [vmem:[%s347 + $0x8] sm:$0xff] %v350
                  %v352 = vld [vmem:[%s346 + $0x20] sm:$0xff]
                  %353 = vst [vmem:[%s347 + $0x10] sm:$0xff] %v352
                  %v354 = vld [vmem:[%s346 + $0x30] sm:$0xff]
                  %355 = vst [vmem:[%s347 + $0x18] sm:$0xff] %v354
                  %v356 = vld [vmem:[%s346 + $0x40] sm:$0xff]
                  %357 = vst [vmem:[%s347 + $0x20] sm:$0xff] %v356
                  %v358 = vld [vmem:[%s346 + $0x50] sm:$0xff]
                  %359 = vst [vmem:[%s347 + $0x28] sm:$0xff] %v358
                  %v360 = vld [vmem:[%s346 + $0x60] sm:$0xff]
                  %361 = vst [vmem:[%s347 + $0x30] sm:$0xff] %v360
                  %v362 = vld [vmem:[%s346 + $0x70] sm:$0xff]
                  %363 = vst [vmem:[%s347 + $0x38] sm:$0xff] %v362
                $region128: #{multi_scale_attention_forward.1} parent=122 // loop_footer
                  %s345 = sadd.s32 1, %s341
                $region129: #{multi_scale_attention_forward.1} parent=122 // loop_footer_branch
                  %340 = sbr.rel target = $region125
                $region130: #{multi_scale_attention_forward.1} parent=122 // loop_exit
                  _
              $region123: #{multi_scale_attention_forward.1} parent=107 // pred_fallthru
                _
              // Predicated region
              $region131: #{multi_scale_attention_forward.1} parent=107 // pred_check
                _
              $region132: #{multi_scale_attention_forward.1} parent=107 // pred_check_branch
                %365 = sbr.rel target = $region134
              $region133: #{multi_scale_attention_forward.1} parent=107 // pred_region
                _
              $region134: #{multi_scale_attention_forward.1} parent=107 // pred_fallthru
                _
            $region108: #{multi_scale_attention_forward.1} parent=103 // pred_fallthru
              _
            // Predicated region
            $region109: #{multi_scale_attention_forward.1} parent=103 // pred_check
              _
            $region110: #{multi_scale_attention_forward.1} parent=103 // pred_check_branch
              %311 = sbr.rel target = $region112
            $region111: #{multi_scale_attention_forward.1} parent=103 // pred_region
              %s313 = ssub.s32 256, 1
              loop: start=0, step=1, limit=1
              $region113: #{multi_scale_attention_forward.1} parent=111 // loop_pre_header
                _
              $region114: #{multi_scale_attention_forward.1} parent=111 // loop_header
                %s315 = sphi 0, %s319
                %p316 = scmp.ge.s32.totalorder %s315, 1
                %s320 = sphi %s305, %s305
                %s321 = sphi %s303, %s303
              $region115: #{multi_scale_attention_forward.1} parent=111 // loop_header_branch
                %318 = sbr.rel (%p316) target = $region119
              $region116: #{multi_scale_attention_forward.1} parent=111 // loop_body
                %v322 = vld [vmem:[%s320] sm:%s313]
                %323 = vst [vmem:[%s321] sm:%s313] %v322
                %v324 = vld [vmem:[%s320 + $0x10] sm:%s313]
                %325 = vst [vmem:[%s321 + $0x8] sm:%s313] %v324
                %v326 = vld [vmem:[%s320 + $0x20] sm:%s313]
                %327 = vst [vmem:[%s321 + $0x10] sm:%s313] %v326
                %v328 = vld [vmem:[%s320 + $0x30] sm:%s313]
                %329 = vst [vmem:[%s321 + $0x18] sm:%s313] %v328
                %v330 = vld [vmem:[%s320 + $0x40] sm:%s313]
                %331 = vst [vmem:[%s321 + $0x20] sm:%s313] %v330
                %v332 = vld [vmem:[%s320 + $0x50] sm:%s313]
                %333 = vst [vmem:[%s321 + $0x28] sm:%s313] %v332
                %v334 = vld [vmem:[%s320 + $0x60] sm:%s313]
                %335 = vst [vmem:[%s321 + $0x30] sm:%s313] %v334
                %v336 = vld [vmem:[%s320 + $0x70] sm:%s313]
                %337 = vst [vmem:[%s321 + $0x38] sm:%s313] %v336
              $region117: #{multi_scale_attention_forward.1} parent=111 // loop_footer
                %s319 = sadd.s32 1, %s315
              $region118: #{multi_scale_attention_forward.1} parent=111 // loop_footer_branch
                %314 = sbr.rel target = $region114
              $region119: #{multi_scale_attention_forward.1} parent=111 // loop_exit
                _
            $region112: #{multi_scale_attention_forward.1} parent=103 // pred_fallthru
              _
          $region104: #{multi_scale_attention_forward.1} parent=99 // pred_fallthru
            _
          %366 = vnop
        $region100: #{multi_scale_attention_forward.1} parent=19 // pred_fallthru
          _
      $region20: #{multi_scale_attention_forward.1} parent=5 // pred_fallthru
        _
      %p367 = scmp.le.s32.totalorder 1, %s10
      %p368 = scmp.lt.s32.totalorder %s10, 3
      %p369 = pnand %p367, %p368
      %p370 = pneg %p369
      // Predicated region
      $region135: #{multi_scale_attention_forward.1} parent=5 // pred_check
        _
      $region136: #{multi_scale_attention_forward.1} parent=5 // pred_check_branch
        %372 = sbr.rel (%p369) target = $region138
      $region137: #{multi_scale_attention_forward.1} parent=5 // pred_region
        %s373 = ssub.s32 %s10, 1
        %s374 = sand.u32 %s23, 1
        %s375 = sand.u32 %s23, 1
        %s376 = smul.addr %s375, 64
        %s377 = scalar_lea.vmem [#allocation2], %s376
        // Predicated region
        $region139: #{multi_scale_attention_forward.1} parent=137 // pred_check
          %p378 = pneg %p36
        $region140: #{multi_scale_attention_forward.1} parent=137 // pred_check_branch
          %380 = sbr.rel (%p378) target = $region142
        $region141: #{multi_scale_attention_forward.1} parent=137 // pred_region
          _
        $region142: #{multi_scale_attention_forward.1} parent=137 // pred_fallthru
          _
        %s381 = sand.u32 %s49, 1
        %s382 = sand.u32 %s49, 1
        %s383 = smul.addr %s382, 64
        %s384 = scalar_lea.vmem [#allocation3], %s383
        // Predicated region
        $region143: #{multi_scale_attention_forward.1} parent=137 // pred_check
          %p385 = pneg %p62
        $region144: #{multi_scale_attention_forward.1} parent=137 // pred_check_branch
          %387 = sbr.rel (%p385) target = $region146
        $region145: #{multi_scale_attention_forward.1} parent=137 // pred_region
          _
        $region146: #{multi_scale_attention_forward.1} parent=137 // pred_fallthru
          _
        %s388 = sand.u32 %s75, 1
        %s389 = sand.u32 %s75, 1
        %s390 = smul.addr %s389, 64
        %s391 = scalar_lea.vmem [#allocation4], %s390
        // Predicated region
        $region147: #{multi_scale_attention_forward.1} parent=137 // pred_check
          %p392 = pneg %p88
        $region148: #{multi_scale_attention_forward.1} parent=137 // pred_check_branch
          %394 = sbr.rel (%p392) target = $region150
        $region149: #{multi_scale_attention_forward.1} parent=137 // pred_region
          _
        $region150: #{multi_scale_attention_forward.1} parent=137 // pred_fallthru
          _
        %s395 = sand.u32 %s23, 1
        %s396 = sand.u32 %s23, 1
        %s397 = smul.addr %s396, 64
        %s398 = scalar_lea.vmem [#allocation2], %s397
        %p399 = pneg %p36
        %p400 = pneg %p33
        %s401 = sand.u32 %s49, 1
        %s402 = sand.u32 %s49, 1
        %s403 = smul.addr %s402, 64
        %s404 = scalar_lea.vmem [#allocation3], %s403
        %p405 = pneg %p62
        %p406 = pneg %p59
        %s407 = sand.u32 %s75, 1
        %s408 = sand.u32 %s75, 1
        %s409 = smul.addr %s408, 64
        %s410 = scalar_lea.vmem [#allocation4], %s409
        %p411 = pneg %p88
        %p412 = pneg %p85
        %p413 = pneg %p109
        %p414 = pneg %p106
        %p415 = pneg %p135
        %p416 = pneg %p132
        %s417 = sand.u32 %s122, 1
        %s418 = sand.u32 %s122, 1
        %s419 = smul.addr %s418, 64
        %s420 = scalar_lea.vmem [#allocation5], %s419
        %v421 = vld [vmem:[%s377] sm:$0xff]
        %v422 = vld [vmem:[%s377 + $0x8] sm:$0xff]
        %v423 = vld [vmem:[%s377 + $0x10] sm:$0xff]
        %v424 = vld [vmem:[%s377 + $0x18] sm:$0xff]
        %v425 = vld [vmem:[%s377 + $0x20] sm:$0xff]
        %v426 = vld [vmem:[%s377 + $0x28] sm:$0xff]
        %v427 = vld [vmem:[%s377 + $0x30] sm:$0xff]
        %v428 = vld [vmem:[%s377 + $0x38] sm:$0xff]
        %v429 = vld [vmem:[%s384] sm:$0xff]
        %v430 = vld [vmem:[%s384 + $0x8] sm:$0xff]
        %v431 = vld [vmem:[%s384 + $0x10] sm:$0xff]
        %v432 = vld [vmem:[%s384 + $0x18] sm:$0xff]
        %v433 = vld [vmem:[%s384 + $0x20] sm:$0xff]
        %v434 = vld [vmem:[%s384 + $0x28] sm:$0xff]
        %v435 = vld [vmem:[%s384 + $0x30] sm:$0xff]
        %v436 = vld [vmem:[%s384 + $0x38] sm:$0xff]
        %v437 = vld [vmem:[%s391] sm:$0xff]
        %v438 = vld [vmem:[%s391 + $0x8] sm:$0xff]
        %v439 = vld [vmem:[%s391 + $0x10] sm:$0xff]
        %v440 = vld [vmem:[%s391 + $0x18] sm:$0xff]
        %v441 = vld [vmem:[%s391 + $0x20] sm:$0xff]
        %v442 = vld [vmem:[%s391 + $0x28] sm:$0xff]
        %v443 = vld [vmem:[%s391 + $0x30] sm:$0xff]
        %v444 = vld [vmem:[%s391 + $0x38] sm:$0xff]
        %v445 = vld [vmem:[%s3] sm:$0xff]
        %v446 = vld [vmem:[%s3 + $0x8] sm:$0xff]
        %v447 = vld [vmem:[%s3 + $0x10] sm:$0xff]
        %v448 = vld [vmem:[%s3 + $0x18] sm:$0xff]
        %v449 = vld [vmem:[%s3 + $0x20] sm:$0xff]
        %v450 = vld [vmem:[%s3 + $0x28] sm:$0xff]
        %v451 = vld [vmem:[%s3 + $0x30] sm:$0xff]
        %v452 = vld [vmem:[%s3 + $0x38] sm:$0xff]
        %v453 = vld [vmem:[%s3 + $0x40] sm:$0xff]
        %v454 = vld [vmem:[%s3 + $0x48] sm:$0xff]
        %v455 = vld [vmem:[%s3 + $0x50] sm:$0xff]
        %v456 = vld [vmem:[%s3 + $0x58] sm:$0xff]
        %v457 = vld [vmem:[%s3 + $0x60] sm:$0xff]
        %v458 = vld [vmem:[%s3 + $0x68] sm:$0xff]
        %v459 = vld [vmem:[%s3 + $0x70] sm:$0xff]
        %v460 = vld [vmem:[%s3 + $0x78] sm:$0xff]
        %v463 = vrot.slane %v429, 1
        %v464 = vrot.slane %v429, 2
        %v465 = vrot.slane %v429, 3
        %v466 = vrot.slane %v429, 4
        %v467 = vrot.slane %v429, 5
        %v468 = vrot.slane %v429, 6
        %v469 = vrot.slane %v429, 7
        %v470 = vrot.slane %v433, 1
        %v471 = vrot.slane %v433, 2
        %v472 = vrot.slane %v433, 3
        %v473 = vrot.slane %v433, 4
        %v474 = vrot.slane %v433, 5
        %v475 = vrot.slane %v433, 6
        %v476 = vrot.slane %v433, 7
        %v477 = vperm.slane %v429, 0
        %v478 = vperm.slane %v463, 0
        %v479 = vperm.slane %v464, 0
        %v480 = vperm.slane %v465, 0
        %v481 = vperm.slane %v466, 0
        %v482 = vperm.slane %v467, 0
        %v483 = vperm.slane %v468, 0
        %v484 = vperm.slane %v469, 0
        %v485 = vperm.slane %v433, 0
        %v486 = vperm.slane %v470, 0
        %v487 = vperm.slane %v471, 0
        %v488 = vperm.slane %v472, 0
        %v489 = vperm.slane %v473, 0
        %v490 = vperm.slane %v474, 0
        %v491 = vperm.slane %v475, 0
        %v492 = vperm.slane %v476, 0
        %v509 = vmul.f32 %v421, %v477
        %v510 = vmul.f32 %v421, %v478
        %v511 = vmul.f32 %v421, %v479
        %v512 = vmul.f32 %v421, %v480
        %v513 = vmul.f32 %v421, %v481
        %v514 = vmul.f32 %v421, %v482
        %v515 = vmul.f32 %v421, %v483
        %v516 = vmul.f32 %v421, %v484
        %v517 = vmul.f32 %v425, %v485
        %v518 = vmul.f32 %v425, %v486
        %v519 = vmul.f32 %v425, %v487
        %v520 = vmul.f32 %v425, %v488
        %v521 = vmul.f32 %v425, %v489
        %v522 = vmul.f32 %v425, %v490
        %v523 = vmul.f32 %v425, %v491
        %v524 = vmul.f32 %v425, %v492
        %v527 = vrot.slane %v430, 1
        %v528 = vrot.slane %v430, 2
        %v529 = vrot.slane %v430, 3
        %v530 = vrot.slane %v430, 4
        %v531 = vrot.slane %v430, 5
        %v532 = vrot.slane %v430, 6
        %v533 = vrot.slane %v430, 7
        %v534 = vrot.slane %v434, 1
        %v535 = vrot.slane %v434, 2
        %v536 = vrot.slane %v434, 3
        %v537 = vrot.slane %v434, 4
        %v538 = vrot.slane %v434, 5
        %v539 = vrot.slane %v434, 6
        %v540 = vrot.slane %v434, 7
        %v541 = vperm.slane %v430, 0
        %v542 = vperm.slane %v527, 0
        %v543 = vperm.slane %v528, 0
        %v544 = vperm.slane %v529, 0
        %v545 = vperm.slane %v530, 0
        %v546 = vperm.slane %v531, 0
        %v547 = vperm.slane %v532, 0
        %v548 = vperm.slane %v533, 0
        %v549 = vperm.slane %v434, 0
        %v550 = vperm.slane %v534, 0
        %v551 = vperm.slane %v535, 0
        %v552 = vperm.slane %v536, 0
        %v553 = vperm.slane %v537, 0
        %v554 = vperm.slane %v538, 0
        %v555 = vperm.slane %v539, 0
        %v556 = vperm.slane %v540, 0
        %v573 = vmul.f32 %v422, %v541
        %v574 = vmul.f32 %v422, %v542
        %v575 = vmul.f32 %v422, %v543
        %v576 = vmul.f32 %v422, %v544
        %v577 = vmul.f32 %v422, %v545
        %v578 = vmul.f32 %v422, %v546
        %v579 = vmul.f32 %v422, %v547
        %v580 = vmul.f32 %v422, %v548
        %v581 = vmul.f32 %v426, %v549
        %v582 = vmul.f32 %v426, %v550
        %v583 = vmul.f32 %v426, %v551
        %v584 = vmul.f32 %v426, %v552
        %v585 = vmul.f32 %v426, %v553
        %v586 = vmul.f32 %v426, %v554
        %v587 = vmul.f32 %v426, %v555
        %v588 = vmul.f32 %v426, %v556
        %v589 = vadd.f32 %v509, %v573
        %v590 = vadd.f32 %v510, %v574
        %v591 = vadd.f32 %v511, %v575
        %v592 = vadd.f32 %v512, %v576
        %v593 = vadd.f32 %v513, %v577
        %v594 = vadd.f32 %v514, %v578
        %v595 = vadd.f32 %v515, %v579
        %v596 = vadd.f32 %v516, %v580
        %v597 = vadd.f32 %v517, %v581
        %v598 = vadd.f32 %v518, %v582
        %v599 = vadd.f32 %v519, %v583
        %v600 = vadd.f32 %v520, %v584
        %v601 = vadd.f32 %v521, %v585
        %v602 = vadd.f32 %v522, %v586
        %v603 = vadd.f32 %v523, %v587
        %v604 = vadd.f32 %v524, %v588
        %v607 = vrot.slane %v431, 1
        %v608 = vrot.slane %v431, 2
        %v609 = vrot.slane %v431, 3
        %v610 = vrot.slane %v431, 4
        %v611 = vrot.slane %v431, 5
        %v612 = vrot.slane %v431, 6
        %v613 = vrot.slane %v431, 7
        %v614 = vrot.slane %v435, 1
        %v615 = vrot.slane %v435, 2
        %v616 = vrot.slane %v435, 3
        %v617 = vrot.slane %v435, 4
        %v618 = vrot.slane %v435, 5
        %v619 = vrot.slane %v435, 6
        %v620 = vrot.slane %v435, 7
        %v621 = vperm.slane %v431, 0
        %v622 = vperm.slane %v607, 0
        %v623 = vperm.slane %v608, 0
        %v624 = vperm.slane %v609, 0
        %v625 = vperm.slane %v610, 0
        %v626 = vperm.slane %v611, 0
        %v627 = vperm.slane %v612, 0
        %v628 = vperm.slane %v613, 0
        %v629 = vperm.slane %v435, 0
        %v630 = vperm.slane %v614, 0
        %v631 = vperm.slane %v615, 0
        %v632 = vperm.slane %v616, 0
        %v633 = vperm.slane %v617, 0
        %v634 = vperm.slane %v618, 0
        %v635 = vperm.slane %v619, 0
        %v636 = vperm.slane %v620, 0
        %v653 = vmul.f32 %v423, %v621
        %v654 = vmul.f32 %v423, %v622
        %v655 = vmul.f32 %v423, %v623
        %v656 = vmul.f32 %v423, %v624
        %v657 = vmul.f32 %v423, %v625
        %v658 = vmul.f32 %v423, %v626
        %v659 = vmul.f32 %v423, %v627
        %v660 = vmul.f32 %v423, %v628
        %v661 = vmul.f32 %v427, %v629
        %v662 = vmul.f32 %v427, %v630
        %v663 = vmul.f32 %v427, %v631
        %v664 = vmul.f32 %v427, %v632
        %v665 = vmul.f32 %v427, %v633
        %v666 = vmul.f32 %v427, %v634
        %v667 = vmul.f32 %v427, %v635
        %v668 = vmul.f32 %v427, %v636
        %v669 = vadd.f32 %v589, %v653
        %v670 = vadd.f32 %v590, %v654
        %v671 = vadd.f32 %v591, %v655
        %v672 = vadd.f32 %v592, %v656
        %v673 = vadd.f32 %v593, %v657
        %v674 = vadd.f32 %v594, %v658
        %v675 = vadd.f32 %v595, %v659
        %v676 = vadd.f32 %v596, %v660
        %v677 = vadd.f32 %v597, %v661
        %v678 = vadd.f32 %v598, %v662
        %v679 = vadd.f32 %v599, %v663
        %v680 = vadd.f32 %v600, %v664
        %v681 = vadd.f32 %v601, %v665
        %v682 = vadd.f32 %v602, %v666
        %v683 = vadd.f32 %v603, %v667
        %v684 = vadd.f32 %v604, %v668
        %v687 = vrot.slane %v432, 1
        %v688 = vrot.slane %v432, 2
        %v689 = vrot.slane %v432, 3
        %v690 = vrot.slane %v432, 4
        %v691 = vrot.slane %v432, 5
        %v692 = vrot.slane %v432, 6
        %v693 = vrot.slane %v432, 7
        %v694 = vrot.slane %v436, 1
        %v695 = vrot.slane %v436, 2
        %v696 = vrot.slane %v436, 3
        %v697 = vrot.slane %v436, 4
        %v698 = vrot.slane %v436, 5
        %v699 = vrot.slane %v436, 6
        %v700 = vrot.slane %v436, 7
        %v701 = vperm.slane %v432, 0
        %v702 = vperm.slane %v687, 0
        %v703 = vperm.slane %v688, 0
        %v704 = vperm.slane %v689, 0
        %v705 = vperm.slane %v690, 0
        %v706 = vperm.slane %v691, 0
        %v707 = vperm.slane %v692, 0
        %v708 = vperm.slane %v693, 0
        %v709 = vperm.slane %v436, 0
        %v710 = vperm.slane %v694, 0
        %v711 = vperm.slane %v695, 0
        %v712 = vperm.slane %v696, 0
        %v713 = vperm.slane %v697, 0
        %v714 = vperm.slane %v698, 0
        %v715 = vperm.slane %v699, 0
        %v716 = vperm.slane %v700, 0
        %v733 = vmul.f32 %v424, %v701
        %v734 = vmul.f32 %v424, %v702
        %v735 = vmul.f32 %v424, %v703
        %v736 = vmul.f32 %v424, %v704
        %v737 = vmul.f32 %v424, %v705
        %v738 = vmul.f32 %v424, %v706
        %v739 = vmul.f32 %v424, %v707
        %v740 = vmul.f32 %v424, %v708
        %v741 = vmul.f32 %v428, %v709
        %v742 = vmul.f32 %v428, %v710
        %v743 = vmul.f32 %v428, %v711
        %v744 = vmul.f32 %v428, %v712
        %v745 = vmul.f32 %v428, %v713
        %v746 = vmul.f32 %v428, %v714
        %v747 = vmul.f32 %v428, %v715
        %v748 = vmul.f32 %v428, %v716
        %v749 = vadd.f32 %v669, %v733
        %v750 = vadd.f32 %v670, %v734
        %v751 = vadd.f32 %v671, %v735
        %v752 = vadd.f32 %v672, %v736
        %v753 = vadd.f32 %v673, %v737
        %v754 = vadd.f32 %v674, %v738
        %v755 = vadd.f32 %v675, %v739
        %v756 = vadd.f32 %v676, %v740
        %v757 = vadd.f32 %v677, %v741
        %v758 = vadd.f32 %v678, %v742
        %v759 = vadd.f32 %v679, %v743
        %v760 = vadd.f32 %v680, %v744
        %v761 = vadd.f32 %v681, %v745
        %v762 = vadd.f32 %v682, %v746
        %v763 = vadd.f32 %v683, %v747
        %v764 = vadd.f32 %v684, %v748
        %v765 = vmul.f32 %v749, 0.5
        %v766 = vmul.f32 %v750, 0.5
        %v767 = vmul.f32 %v751, 0.5
        %v768 = vmul.f32 %v752, 0.5
        %v769 = vmul.f32 %v753, 0.5
        %v770 = vmul.f32 %v754, 0.5
        %v771 = vmul.f32 %v755, 0.5
        %v772 = vmul.f32 %v756, 0.5
        %v773 = vmul.f32 %v757, 0.5
        %v774 = vmul.f32 %v758, 0.5
        %v775 = vmul.f32 %v759, 0.5
        %v776 = vmul.f32 %v760, 0.5
        %v777 = vmul.f32 %v761, 0.5
        %v778 = vmul.f32 %v762, 0.5
        %v779 = vmul.f32 %v763, 0.5
        %v780 = vmul.f32 %v764, 0.5
        %782 = vset.pattern.permute.xlu0 0
        %783 = vperm.xlu0 %782, %v445
        %v784 = vpop.permute.xlu0 %783
        %787 = vset.pattern.permute.xlu0 0
        %788 = vperm.xlu0 %787, %v446
        %v789 = vpop.permute.xlu0 %788
        %792 = vset.pattern.permute.xlu0 0
        %793 = vperm.xlu0 %792, %v447
        %v794 = vpop.permute.xlu0 %793
        %797 = vset.pattern.permute.xlu0 0
        %798 = vperm.xlu0 %797, %v448
        %v799 = vpop.permute.xlu0 %798
        %802 = vset.pattern.permute.xlu0 0
        %803 = vperm.xlu0 %802, %v449
        %v804 = vpop.permute.xlu0 %803
        %807 = vset.pattern.permute.xlu0 0
        %808 = vperm.xlu0 %807, %v450
        %v809 = vpop.permute.xlu0 %808
        %812 = vset.pattern.permute.xlu0 0
        %813 = vperm.xlu0 %812, %v451
        %v814 = vpop.permute.xlu0 %813
        %817 = vset.pattern.permute.xlu0 0
        %818 = vperm.xlu0 %817, %v452
        %v819 = vpop.permute.xlu0 %818
        %822 = vset.pattern.permute.xlu0 0
        %823 = vperm.xlu0 %822, %v453
        %v824 = vpop.permute.xlu0 %823
        %827 = vset.pattern.permute.xlu0 0
        %828 = vperm.xlu0 %827, %v454
        %v829 = vpop.permute.xlu0 %828
        %832 = vset.pattern.permute.xlu0 0
        %833 = vperm.xlu0 %832, %v455
        %v834 = vpop.permute.xlu0 %833
        %837 = vset.pattern.permute.xlu0 0
        %838 = vperm.xlu0 %837, %v456
        %v839 = vpop.permute.xlu0 %838
        %842 = vset.pattern.permute.xlu0 0
        %843 = vperm.xlu0 %842, %v457
        %v844 = vpop.permute.xlu0 %843
        %847 = vset.pattern.permute.xlu0 0
        %848 = vperm.xlu0 %847, %v458
        %v849 = vpop.permute.xlu0 %848
        %852 = vset.pattern.permute.xlu0 0
        %853 = vperm.xlu0 %852, %v459
        %v854 = vpop.permute.xlu0 %853
        %857 = vset.pattern.permute.xlu0 0
        %858 = vperm.xlu0 %857, %v460
        %v859 = vpop.permute.xlu0 %858
        %v861 = vadd.f32 %v765, %v784
        %v862 = vadd.f32 %v766, %v789
        %v863 = vadd.f32 %v767, %v794
        %v864 = vadd.f32 %v768, %v799
        %v865 = vadd.f32 %v769, %v804
        %v866 = vadd.f32 %v770, %v809
        %v867 = vadd.f32 %v771, %v814
        %v868 = vadd.f32 %v772, %v819
        %v869 = vadd.f32 %v773, %v824
        %v870 = vadd.f32 %v774, %v829
        %v871 = vadd.f32 %v775, %v834
        %v872 = vadd.f32 %v776, %v839
        %v873 = vadd.f32 %v777, %v844
        %v874 = vadd.f32 %v778, %v849
        %v875 = vadd.f32 %v779, %v854
        %v876 = vadd.f32 %v780, %v859
        %v877 = vmax.f32 %v861, %v863
        %v878 = vmax.f32 %v862, %v864
        %v879 = vmax.f32 %v877, %v865
        %v880 = vmax.f32 %v878, %v866
        %v881 = vmax.f32 %v879, %v867
        %v882 = vmax.f32 %v880, %v868
        %v883 = vmax.f32 %v881, %v882
        %v884 = vmax.f32 %v869, %v871
        %v885 = vmax.f32 %v870, %v872
        %v886 = vmax.f32 %v884, %v873
        %v887 = vmax.f32 %v885, %v874
        %v888 = vmax.f32 %v886, %v875
        %v889 = vmax.f32 %v887, %v876
        %v890 = vmax.f32 %v888, %v889
        %v891 = vsub.f32 %v861, %v883
        %v892 = vsub.f32 %v862, %v883
        %v893 = vsub.f32 %v863, %v883
        %v894 = vsub.f32 %v864, %v883
        %v895 = vsub.f32 %v865, %v883
        %v896 = vsub.f32 %v866, %v883
        %v897 = vsub.f32 %v867, %v883
        %v898 = vsub.f32 %v868, %v883
        %v899 = vsub.f32 %v869, %v890
        %v900 = vsub.f32 %v870, %v890
        %v901 = vsub.f32 %v871, %v890
        %v902 = vsub.f32 %v872, %v890
        %v903 = vsub.f32 %v873, %v890
        %v904 = vsub.f32 %v874, %v890
        %v905 = vsub.f32 %v875, %v890
        %v906 = vsub.f32 %v876, %v890
        %v907 = vmul.f32 %v891, 1.442695
        %v908 = vpow.pop %v907
        %v909 = vmul.f32 %v892, 1.442695
        %v910 = vpow.pop %v909
        %v911 = vmul.f32 %v893, 1.442695
        %v912 = vpow.pop %v911
        %v913 = vmul.f32 %v894, 1.442695
        %v914 = vpow.pop %v913
        %v915 = vmul.f32 %v895, 1.442695
        %v916 = vpow.pop %v915
        %v917 = vmul.f32 %v896, 1.442695
        %v918 = vpow.pop %v917
        %v919 = vmul.f32 %v897, 1.442695
        %v920 = vpow.pop %v919
        %v921 = vmul.f32 %v898, 1.442695
        %v922 = vpow.pop %v921
        %v923 = vmul.f32 %v899, 1.442695
        %v924 = vpow.pop %v923
        %v925 = vmul.f32 %v900, 1.442695
        %v926 = vpow.pop %v925
        %v927 = vmul.f32 %v901, 1.442695
        %v928 = vpow.pop %v927
        %v929 = vmul.f32 %v902, 1.442695
        %v930 = vpow.pop %v929
        %v931 = vmul.f32 %v903, 1.442695
        %v932 = vpow.pop %v931
        %v933 = vmul.f32 %v904, 1.442695
        %v934 = vpow.pop %v933
        %v935 = vmul.f32 %v905, 1.442695
        %v936 = vpow.pop %v935
        %v937 = vmul.f32 %v906, 1.442695
        %v938 = vpow.pop %v937
        %v939 = vadd.f32 %v908, %v910
        %v940 = vadd.f32 %v939, %v912
        %v941 = vadd.f32 %v940, %v914
        %v942 = vadd.f32 %v941, %v916
        %v943 = vadd.f32 %v942, %v918
        %v944 = vadd.f32 %v943, %v920
        %v945 = vadd.f32 %v944, %v922
        %v946 = vadd.f32 %v924, %v926
        %v947 = vadd.f32 %v946, %v928
        %v948 = vadd.f32 %v947, %v930
        %v949 = vadd.f32 %v948, %v932
        %v950 = vadd.f32 %v949, %v934
        %v951 = vadd.f32 %v950, %v936
        %v952 = vadd.f32 %v951, %v938
        %v953 = vrcp.pop %v945
        %v954 = vrcp.pop %v952
        %v955 = vmul.f32 %v908, %v953
        %v956 = vmul.f32 %v910, %v953
        %v957 = vmul.f32 %v912, %v953
        %v958 = vmul.f32 %v914, %v953
        %v959 = vmul.f32 %v916, %v953
        %v960 = vmul.f32 %v918, %v953
        %v961 = vmul.f32 %v920, %v953
        %v962 = vmul.f32 %v922, %v953
        %v963 = vmul.f32 %v924, %v954
        %v964 = vmul.f32 %v926, %v954
        %v965 = vmul.f32 %v928, %v954
        %v966 = vmul.f32 %v930, %v954
        %v967 = vmul.f32 %v932, %v954
        %v968 = vmul.f32 %v934, %v954
        %v969 = vmul.f32 %v936, %v954
        %v970 = vmul.f32 %v938, %v954
        %v971 = vperm.slane %v437, 0
        %v972 = vperm.slane %v438, 0
        %v973 = vperm.slane %v439, 0
        %v974 = vperm.slane %v440, 0
        %v975 = vperm.slane %v441, 0
        %v976 = vperm.slane %v442, 0
        %v977 = vperm.slane %v443, 0
        %v978 = vperm.slane %v444, 0
        %v979 = vmul.f32 %v955, %v971
        %v980 = vmul.f32 %v955, %v972
        %v981 = vmul.f32 %v955, %v973
        %v982 = vmul.f32 %v955, %v974
        %v983 = vmul.f32 %v963, %v975
        %v984 = vmul.f32 %v963, %v976
        %v985 = vmul.f32 %v963, %v977
        %v986 = vmul.f32 %v963, %v978
        %v987 = vperm.slane %v437, 1
        %v988 = vperm.slane %v438, 1
        %v989 = vperm.slane %v439, 1
        %v990 = vperm.slane %v440, 1
        %v991 = vperm.slane %v441, 1
        %v992 = vperm.slane %v442, 1
        %v993 = vperm.slane %v443, 1
        %v994 = vperm.slane %v444, 1
        %v995 = vmul.f32 %v956, %v987
        %v996 = vmul.f32 %v956, %v988
        %v997 = vmul.f32 %v956, %v989
        %v998 = vmul.f32 %v956, %v990
        %v999 = vmul.f32 %v964, %v991
        %v1000 = vmul.f32 %v964, %v992
        %v1001 = vmul.f32 %v964, %v993
        %v1002 = vmul.f32 %v964, %v994
        %v1003 = vadd.f32 %v979, %v995
        %v1004 = vadd.f32 %v980, %v996
        %v1005 = vadd.f32 %v981, %v997
        %v1006 = vadd.f32 %v982, %v998
        %v1007 = vadd.f32 %v983, %v999
        %v1008 = vadd.f32 %v984, %v1000
        %v1009 = vadd.f32 %v985, %v1001
        %v1010 = vadd.f32 %v986, %v1002
        %v1011 = vperm.slane %v437, 2
        %v1012 = vperm.slane %v438, 2
        %v1013 = vperm.slane %v439, 2
        %v1014 = vperm.slane %v440, 2
        %v1015 = vperm.slane %v441, 2
        %v1016 = vperm.slane %v442, 2
        %v1017 = vperm.slane %v443, 2
        %v1018 = vperm.slane %v444, 2
        %v1019 = vmul.f32 %v957, %v1011
        %v1020 = vmul.f32 %v957, %v1012
        %v1021 = vmul.f32 %v957, %v1013
        %v1022 = vmul.f32 %v957, %v1014
        %v1023 = vmul.f32 %v965, %v1015
        %v1024 = vmul.f32 %v965, %v1016
        %v1025 = vmul.f32 %v965, %v1017
        %v1026 = vmul.f32 %v965, %v1018
        %v1027 = vadd.f32 %v1003, %v1019
        %v1028 = vadd.f32 %v1004, %v1020
        %v1029 = vadd.f32 %v1005, %v1021
        %v1030 = vadd.f32 %v1006, %v1022
        %v1031 = vadd.f32 %v1007, %v1023
        %v1032 = vadd.f32 %v1008, %v1024
        %v1033 = vadd.f32 %v1009, %v1025
        %v1034 = vadd.f32 %v1010, %v1026
        %v1035 = vperm.slane %v437, 3
        %v1036 = vperm.slane %v438, 3
        %v1037 = vperm.slane %v439, 3
        %v1038 = vperm.slane %v440, 3
        %v1039 = vperm.slane %v441, 3
        %v1040 = vperm.slane %v442, 3
        %v1041 = vperm.slane %v443, 3
        %v1042 = vperm.slane %v444, 3
        %v1043 = vmul.f32 %v958, %v1035
        %v1044 = vmul.f32 %v958, %v1036
        %v1045 = vmul.f32 %v958, %v1037
        %v1046 = vmul.f32 %v958, %v1038
        %v1047 = vmul.f32 %v966, %v1039
        %v1048 = vmul.f32 %v966, %v1040
        %v1049 = vmul.f32 %v966, %v1041
        %v1050 = vmul.f32 %v966, %v1042
        %v1051 = vadd.f32 %v1027, %v1043
        %v1052 = vadd.f32 %v1028, %v1044
        %v1053 = vadd.f32 %v1029, %v1045
        %v1054 = vadd.f32 %v1030, %v1046
        %v1055 = vadd.f32 %v1031, %v1047
        %v1056 = vadd.f32 %v1032, %v1048
        %v1057 = vadd.f32 %v1033, %v1049
        %v1058 = vadd.f32 %v1034, %v1050
        %v1059 = vperm.slane %v437, 4
        %v1060 = vperm.slane %v438, 4
        %v1061 = vperm.slane %v439, 4
        %v1062 = vperm.slane %v440, 4
        %v1063 = vperm.slane %v441, 4
        %v1064 = vperm.slane %v442, 4
        %v1065 = vperm.slane %v443, 4
        %v1066 = vperm.slane %v444, 4
        %v1067 = vmul.f32 %v959, %v1059
        %v1068 = vmul.f32 %v959, %v1060
        %v1069 = vmul.f32 %v959, %v1061
        %v1070 = vmul.f32 %v959, %v1062
        %v1071 = vmul.f32 %v967, %v1063
        %v1072 = vmul.f32 %v967, %v1064
        %v1073 = vmul.f32 %v967, %v1065
        %v1074 = vmul.f32 %v967, %v1066
        %v1075 = vadd.f32 %v1051, %v1067
        %v1076 = vadd.f32 %v1052, %v1068
        %v1077 = vadd.f32 %v1053, %v1069
        %v1078 = vadd.f32 %v1054, %v1070
        %v1079 = vadd.f32 %v1055, %v1071
        %v1080 = vadd.f32 %v1056, %v1072
        %v1081 = vadd.f32 %v1057, %v1073
        %v1082 = vadd.f32 %v1058, %v1074
        %v1083 = vperm.slane %v437, 5
        %v1084 = vperm.slane %v438, 5
        %v1085 = vperm.slane %v439, 5
        %v1086 = vperm.slane %v440, 5
        %v1087 = vperm.slane %v441, 5
        %v1088 = vperm.slane %v442, 5
        %v1089 = vperm.slane %v443, 5
        %v1090 = vperm.slane %v444, 5
        %v1091 = vmul.f32 %v960, %v1083
        %v1092 = vmul.f32 %v960, %v1084
        %v1093 = vmul.f32 %v960, %v1085
        %v1094 = vmul.f32 %v960, %v1086
        %v1095 = vmul.f32 %v968, %v1087
        %v1096 = vmul.f32 %v968, %v1088
        %v1097 = vmul.f32 %v968, %v1089
        %v1098 = vmul.f32 %v968, %v1090
        %v1099 = vadd.f32 %v1075, %v1091
        %v1100 = vadd.f32 %v1076, %v1092
        %v1101 = vadd.f32 %v1077, %v1093
        %v1102 = vadd.f32 %v1078, %v1094
        %v1103 = vadd.f32 %v1079, %v1095
        %v1104 = vadd.f32 %v1080, %v1096
        %v1105 = vadd.f32 %v1081, %v1097
        %v1106 = vadd.f32 %v1082, %v1098
        %v1107 = vperm.slane %v437, 6
        %v1108 = vperm.slane %v438, 6
        %v1109 = vperm.slane %v439, 6
        %v1110 = vperm.slane %v440, 6
        %v1111 = vperm.slane %v441, 6
        %v1112 = vperm.slane %v442, 6
        %v1113 = vperm.slane %v443, 6
        %v1114 = vperm.slane %v444, 6
        %v1115 = vmul.f32 %v961, %v1107
        %v1116 = vmul.f32 %v961, %v1108
        %v1117 = vmul.f32 %v961, %v1109
        %v1118 = vmul.f32 %v961, %v1110
        %v1119 = vmul.f32 %v969, %v1111
        %v1120 = vmul.f32 %v969, %v1112
        %v1121 = vmul.f32 %v969, %v1113
        %v1122 = vmul.f32 %v969, %v1114
        %v1123 = vadd.f32 %v1099, %v1115
        %v1124 = vadd.f32 %v1100, %v1116
        %v1125 = vadd.f32 %v1101, %v1117
        %v1126 = vadd.f32 %v1102, %v1118
        %v1127 = vadd.f32 %v1103, %v1119
        %v1128 = vadd.f32 %v1104, %v1120
        %v1129 = vadd.f32 %v1105, %v1121
        %v1130 = vadd.f32 %v1106, %v1122
        %v1131 = vperm.slane %v437, 7
        %v1132 = vperm.slane %v438, 7
        %v1133 = vperm.slane %v439, 7
        %v1134 = vperm.slane %v440, 7
        %v1135 = vperm.slane %v441, 7
        %v1136 = vperm.slane %v442, 7
        %v1137 = vperm.slane %v443, 7
        %v1138 = vperm.slane %v444, 7
        %v1139 = vmul.f32 %v962, %v1131
        %v1140 = vmul.f32 %v962, %v1132
        %v1141 = vmul.f32 %v962, %v1133
        %v1142 = vmul.f32 %v962, %v1134
        %v1143 = vmul.f32 %v970, %v1135
        %v1144 = vmul.f32 %v970, %v1136
        %v1145 = vmul.f32 %v970, %v1137
        %v1146 = vmul.f32 %v970, %v1138
        %v1147 = vadd.f32 %v1123, %v1139
        %v1148 = vadd.f32 %v1124, %v1140
        %v1149 = vadd.f32 %v1125, %v1141
        %v1150 = vadd.f32 %v1126, %v1142
        %v1151 = vadd.f32 %v1127, %v1143
        %v1152 = vadd.f32 %v1128, %v1144
        %v1153 = vadd.f32 %v1129, %v1145
        %v1154 = vadd.f32 %v1130, %v1146
        %1155 = vst [vmem:[%s420] sm:$0xff] %v1147
        %1156 = vst [vmem:[%s420 + $0x8] sm:$0xff] %v1148
        %1157 = vst [vmem:[%s420 + $0x10] sm:$0xff] %v1149
        %1158 = vst [vmem:[%s420 + $0x18] sm:$0xff] %v1150
        %1159 = vst [vmem:[%s420 + $0x20] sm:$0xff] %v1151
        %1160 = vst [vmem:[%s420 + $0x28] sm:$0xff] %v1152
        %1161 = vst [vmem:[%s420 + $0x30] sm:$0xff] %v1153
        %1162 = vst [vmem:[%s420 + $0x38] sm:$0xff] %v1154
        %s1163 = sand.u32 %s122, 1
        %s1164 = sand.u32 %s122, 1
        %s1165 = smul.addr %s1164, 64
        %s1166 = scalar_lea.vmem [#allocation5], %s1165
        // Predicated region
        $region151: #{multi_scale_attention_forward.1} parent=137 // pred_check
          %p1167 = pneg %p132
        $region152: #{multi_scale_attention_forward.1} parent=137 // pred_check_branch
          %1169 = sbr.rel (%p1167) target = $region154
        $region153: #{multi_scale_attention_forward.1} parent=137 // pred_region
          %s1170 = smul.addr %s15, 8
          %s1171 = scalar_lea.vmem %s4, %s1170
          // Predicated region
          $region155: #{multi_scale_attention_forward.1} parent=153 // pred_check
            _
          $region156: #{multi_scale_attention_forward.1} parent=153 // pred_check_branch
            %1173 = sbr.rel (0) target = $region158
          $region157: #{multi_scale_attention_forward.1} parent=153 // pred_region
            // Predicated region
            $region159: #{multi_scale_attention_forward.1} parent=157 // pred_check
              _
            $region160: #{multi_scale_attention_forward.1} parent=157 // pred_check_branch
              %1175 = sbr.rel (0) target = $region162
            $region161: #{multi_scale_attention_forward.1} parent=157 // pred_region
              // Predicated region
              $region174: #{multi_scale_attention_forward.1} parent=161 // pred_check
                _
              $region175: #{multi_scale_attention_forward.1} parent=161 // pred_check_branch
                %1205 = sbr.rel (0) target = $region177
              $region176: #{multi_scale_attention_forward.1} parent=161 // pred_region
                loop: start=0, step=1, limit=1
                $region178: #{multi_scale_attention_forward.1} parent=176 // loop_pre_header
                  _
                $region179: #{multi_scale_attention_forward.1} parent=176 // loop_header
                  %s1207 = sphi 0, %s1211
                  %p1208 = scmp.ge.s32.totalorder %s1207, 1
                  %s1212 = sphi %s1166, %s1166
                  %s1213 = sphi %s1171, %s1171
                $region180: #{multi_scale_attention_forward.1} parent=176 // loop_header_branch
                  %1210 = sbr.rel (%p1208) target = $region184
                $region181: #{multi_scale_attention_forward.1} parent=176 // loop_body
                  %v1214 = vld [vmem:[%s1212] sm:$0xff]
                  %1215 = vst [vmem:[%s1213] sm:$0xff] %v1214
                  %v1216 = vld [vmem:[%s1212 + $0x8] sm:$0xff]
                  %1217 = vst [vmem:[%s1213 + $0x10] sm:$0xff] %v1216
                  %v1218 = vld [vmem:[%s1212 + $0x10] sm:$0xff]
                  %1219 = vst [vmem:[%s1213 + $0x20] sm:$0xff] %v1218
                  %v1220 = vld [vmem:[%s1212 + $0x18] sm:$0xff]
                  %1221 = vst [vmem:[%s1213 + $0x30] sm:$0xff] %v1220
                  %v1222 = vld [vmem:[%s1212 + $0x20] sm:$0xff]
                  %1223 = vst [vmem:[%s1213 + $0x40] sm:$0xff] %v1222
                  %v1224 = vld [vmem:[%s1212 + $0x28] sm:$0xff]
                  %1225 = vst [vmem:[%s1213 + $0x50] sm:$0xff] %v1224
                  %v1226 = vld [vmem:[%s1212 + $0x30] sm:$0xff]
                  %1227 = vst [vmem:[%s1213 + $0x60] sm:$0xff] %v1226
                  %v1228 = vld [vmem:[%s1212 + $0x38] sm:$0xff]
                  %1229 = vst [vmem:[%s1213 + $0x70] sm:$0xff] %v1228
                $region182: #{multi_scale_attention_forward.1} parent=176 // loop_footer
                  %s1211 = sadd.s32 1, %s1207
                $region183: #{multi_scale_attention_forward.1} parent=176 // loop_footer_branch
                  %1206 = sbr.rel target = $region179
                $region184: #{multi_scale_attention_forward.1} parent=176 // loop_exit
                  _
              $region177: #{multi_scale_attention_forward.1} parent=161 // pred_fallthru
                _
              // Predicated region
              $region185: #{multi_scale_attention_forward.1} parent=161 // pred_check
                _
              $region186: #{multi_scale_attention_forward.1} parent=161 // pred_check_branch
                %1231 = sbr.rel target = $region188
              $region187: #{multi_scale_attention_forward.1} parent=161 // pred_region
                _
              $region188: #{multi_scale_attention_forward.1} parent=161 // pred_fallthru
                _
            $region162: #{multi_scale_attention_forward.1} parent=157 // pred_fallthru
              _
            // Predicated region
            $region163: #{multi_scale_attention_forward.1} parent=157 // pred_check
              _
            $region164: #{multi_scale_attention_forward.1} parent=157 // pred_check_branch
              %1177 = sbr.rel target = $region166
            $region165: #{multi_scale_attention_forward.1} parent=157 // pred_region
              %s1179 = ssub.s32 256, 1
              loop: start=0, step=1, limit=1
              $region167: #{multi_scale_attention_forward.1} parent=165 // loop_pre_header
                _
              $region168: #{multi_scale_attention_forward.1} parent=165 // loop_header
                %s1181 = sphi 0, %s1185
                %p1182 = scmp.ge.s32.totalorder %s1181, 1
                %s1186 = sphi %s1166, %s1166
                %s1187 = sphi %s1171, %s1171
              $region169: #{multi_scale_attention_forward.1} parent=165 // loop_header_branch
                %1184 = sbr.rel (%p1182) target = $region173
              $region170: #{multi_scale_attention_forward.1} parent=165 // loop_body
                %v1188 = vld [vmem:[%s1186] sm:%s1179]
                %1189 = vst [vmem:[%s1187] sm:%s1179] %v1188
                %v1190 = vld [vmem:[%s1186 + $0x8] sm:%s1179]
                %1191 = vst [vmem:[%s1187 + $0x10] sm:%s1179] %v1190
                %v1192 = vld [vmem:[%s1186 + $0x10] sm:%s1179]
                %1193 = vst [vmem:[%s1187 + $0x20] sm:%s1179] %v1192
                %v1194 = vld [vmem:[%s1186 + $0x18] sm:%s1179]
                %1195 = vst [vmem:[%s1187 + $0x30] sm:%s1179] %v1194
                %v1196 = vld [vmem:[%s1186 + $0x20] sm:%s1179]
                %1197 = vst [vmem:[%s1187 + $0x40] sm:%s1179] %v1196
                %v1198 = vld [vmem:[%s1186 + $0x28] sm:%s1179]
                %1199 = vst [vmem:[%s1187 + $0x50] sm:%s1179] %v1198
                %v1200 = vld [vmem:[%s1186 + $0x30] sm:%s1179]
                %1201 = vst [vmem:[%s1187 + $0x60] sm:%s1179] %v1200
                %v1202 = vld [vmem:[%s1186 + $0x38] sm:%s1179]
                %1203 = vst [vmem:[%s1187 + $0x70] sm:%s1179] %v1202
              $region171: #{multi_scale_attention_forward.1} parent=165 // loop_footer
                %s1185 = sadd.s32 1, %s1181
              $region172: #{multi_scale_attention_forward.1} parent=165 // loop_footer_branch
                %1180 = sbr.rel target = $region168
              $region173: #{multi_scale_attention_forward.1} parent=165 // loop_exit
                _
            $region166: #{multi_scale_attention_forward.1} parent=157 // pred_fallthru
              _
          $region158: #{multi_scale_attention_forward.1} parent=153 // pred_fallthru
            _
          %1232 = vnop
        $region154: #{multi_scale_attention_forward.1} parent=137 // pred_fallthru
          _
      $region138: #{multi_scale_attention_forward.1} parent=5 // pred_fallthru
        _
      %p1233 = scmp.le.s32.totalorder 2, %s10
      // Predicated region
      $region189: #{multi_scale_attention_forward.1} parent=5 // pred_check
        %p1234 = pneg %p1233
      $region190: #{multi_scale_attention_forward.1} parent=5 // pred_check_branch
        %1236 = sbr.rel (%p1234) target = $region192
      $region191: #{multi_scale_attention_forward.1} parent=5 // pred_region
        %s1237 = ssub.s32 %s10, 2
        // Predicated region
        $region193: #{multi_scale_attention_forward.1} parent=191 // pred_check
          %p1238 = pneg %p138
        $region194: #{multi_scale_attention_forward.1} parent=191 // pred_check_branch
          %1240 = sbr.rel (%p1238) target = $region196
        $region195: #{multi_scale_attention_forward.1} parent=191 // pred_region
          %s1241 = sand.u32 %s123, 1
          %s1242 = sand.u32 %s123, 1
          %s1243 = smul.addr %s1242, 64
          %s1244 = scalar_lea.vmem [#allocation5], %s1243
        $region196: #{multi_scale_attention_forward.1} parent=191 // pred_fallthru
          _
      $region192: #{multi_scale_attention_forward.1} parent=5 // pred_fallthru
        _
    $region6: #{multi_scale_attention_forward.1} parent=1 // loop_footer
      %s14 = sadd.s32 1, %s10
    $region7: #{multi_scale_attention_forward.1} parent=1 // loop_footer_branch
      %9 = sbr.rel target = $region3
    $region8: #{multi_scale_attention_forward.1} parent=1 // loop_exit
      _

</llo_original>
